<compile_context>
chip_gen: v7x
topology: tpu7x:2x2x1
jax: 0.10.0
libtpu: 0.0.40
codegen_flags: <defaults>
</compile_context>

<pallas_src>
import jax
import jax.numpy as jnp
from jax.experimental import pallas as pl
from jax.experimental.pallas import tpu as pltpu


PACK_W = 128          # lane-dense packed-output width
NUM_FIELDS = 6        # logits | pred_boxes(cxcywh) | boxes(xyxy) | scores | labels | hs


# ----------------------------- Pallas kernel -------------------------------
def _build_kernel(B, S, Q, D, NC):
    BQ = B * Q

    def kernel(x_ref, w1_ref, w2_ref, qe_ref, wffn_ref,
               whead_ref, bhead_ref, boxmat_ref, out_ref):
        # ---- "backbone" (1x1 conv == channel matmul) + "encoder" projection,
        #      computed for the whole batch at once (MXU sees M = B*S).
        x = x_ref[...]                                               # (B*S, Cin)
        feat = jnp.maximum(
            jnp.dot(x, w1_ref[...], preferred_element_type=jnp.float32), 0.0)
        mem = jnp.dot(feat, w2_ref[...],
                      preferred_element_type=jnp.float32)            # (B*S, D)

        # ---- "decoder": learned-query cross-attention, per batch element.
        q = qe_ref[...]                                              # (Q, D)
        inv_sqrt_d = 1.0 / (D ** 0.5)
        hs_parts = []
        for b in range(B):                      # B tiny & static at trace time
            mem_b = mem[b * S:(b + 1) * S]                           # (S, D)
            att = jax.lax.dot_general(
                q, mem_b, (((1,), (1,)), ((), ())),
                preferred_element_type=jnp.float32) * inv_sqrt_d     # (Q, S)
            att = att - jnp.max(att, axis=-1, keepdims=True)
            e = jnp.exp(att)
            p = e * pl.reciprocal(jnp.sum(e, axis=-1, keepdims=True),
                                  approx=True)                       # EUP slot
            ctx = jnp.dot(p, mem_b, preferred_element_type=jnp.float32)
            hs_parts.append(jnp.maximum(
                jnp.dot(ctx, wffn_ref[...],
                        preferred_element_type=jnp.float32), 0.0))
        hs = jnp.concatenate(hs_parts, axis=0)                       # (B*Q, D)

        # ---- fused score + bbox heads (single matmul, single bias add)
        head = (jnp.dot(hs, whead_ref[...],
                        preferred_element_type=jnp.float32)
                + bhead_ref[...])                                    # (B*Q, NC+4)
        logits = head[:, :NC]
        pboxes = jax.nn.sigmoid(head[:, NC:NC + 4])                  # cxcywh

        # ---- TrackerPostProcess + score/label path of _post_process_single_image
        prob = jax.nn.sigmoid(logits)
        scores = jnp.max(prob, axis=-1, keepdims=True)               # (B*Q, 1)
        idx = jax.lax.broadcasted_iota(jnp.int32, prob.shape, 1)
        # first index attaining the max (matches torch .max(-1) tie-breaking)
        labels = jnp.min(jnp.where(prob == scores, idx, NC),
                         axis=-1, keepdims=True).astype(jnp.float32)
        # cxcywh -> xyxy with the image-size scale pre-folded into the matrix
        xyxy = jnp.dot(pboxes, boxmat_ref[...],
                       preferred_element_type=jnp.float32)           # (B*Q, 4)

        # ---- single lane-dense packed output slab (one dense writeback DMA);
        #      every store below is at lane offset 0 / sublane offset % 8 == 0.
        out_ref[...] = jnp.zeros_like(out_ref)
        out_ref[0 * BQ:1 * BQ, 0:NC] = logits
        out_ref[1 * BQ:2 * BQ, 0:4] = pboxes
        out_ref[2 * BQ:3 * BQ, 0:4] = xyxy
        out_ref[3 * BQ:4 * BQ, 0:1] = scores
        out_ref[4 * BQ:5 * BQ, 0:1] = labels
        out_ref[5 * BQ:6 * BQ, 0:D] = hs

    return kernel


# ------------------------------- wrapper ------------------------------------
def rtdetr_mot_frame(x_nchw, params, orig_img_size):
    """Run one frame through backbone/encoder/decoder + TrackerPostProcess."""
    B, Cin, H, W = x_nchw.shape
    S = H * W
    # NCHW -> (B*S, Cin) tokens: channels on the lane axis, whole batch fused.
    x = jnp.transpose(x_nchw, (0, 2, 3, 1)).reshape(B * S, Cin).astype(jnp.float32)

    w1, w2 = params["w1"], params["w2"]
    qe, wffn = params["query_embed"], params["w_ffn"]
    D = w2.shape[-1]
    Q = qe.shape[0]
    NC = params["w_score"].shape[-1]
    assert NC <= PACK_W and D <= PACK_W and NC + 4 <= PACK_W

    # fuse score/bbox heads into one weight/bias pair
    whead = jnp.concatenate([params["w_score"], params["w_bbox"]], axis=-1)  # (D, NC+4)
    bhead = jnp.concatenate([params["b_score"], params["b_bbox"]], axis=-1)  # (1, NC+4)

    # cxcywh -> xyxy matrix with the image-size scale folded in:
    # (p @ M) * s == p @ (M * s)
    img_w, img_h = orig_img_size
    boxmat = jnp.array([[1.0, 0.0, 1.0, 0.0],
                        [0.0, 1.0, 0.0, 1.0],
                        [-0.5, 0.0, 0.5, 0.0],
                        [0.0, -0.5, 0.0, 0.5]], dtype=jnp.float32)
    scale = jnp.array([img_w, img_h, img_w, img_h], dtype=jnp.float32)
    boxmat_scaled = boxmat * scale[None, :]

    kernel = _build_kernel(B, S, Q, D, NC)
    vmem = pl.BlockSpec(memory_space=pltpu.MemorySpace.VMEM)   # whole array, VMEM
    packed = pl.pallas_call(
        kernel,
        out_shape=jax.ShapeDtypeStruct((NUM_FIELDS * B * Q, PACK_W), jnp.float32),
        in_specs=[vmem] * 8,
        out_specs=vmem,
    )(x, w1, w2, qe, wffn, whead, bhead, boxmat_scaled)

    BQ = B * Q

    def field(f, w):
        return packed[f * BQ:(f + 1) * BQ, :w].reshape(B, Q, w)

    return {
        "pred_logits": field(0, NC),
        "pred_boxes": field(1, 4),                       # cxcywh
        "boxes": field(2, 4),                            # xyxy, scaled
        "scores": field(3, 1)[..., 0],
        "labels": field(4, 1)[..., 0].astype(jnp.int32),
        "hs": field(5, D),                               # output_embedding
    }


def rtdetr_mot_forward(frames, params, orig_img_size):
    """Mirror RTDETRForMOT.forward (eval path): loop over frames, collect
    pred_logits / pred_boxes, return last frame's post-processed tracks."""
    outputs = {"pred_logits": [], "pred_boxes": []}
    track_instances = None
    for frame in frames:
        res = rtdetr_mot_frame(frame, params, orig_img_size)
        outputs["pred_logits"].append(res["pred_logits"])
        outputs["pred_boxes"].append(res["pred_boxes"])
        # TODO(synk): track_embed / runtime_track association is an injected
        # stateful module; tracks here are re-initialized each frame.
        track_instances = {
            "boxes": res["boxes"],
            "scores": res["scores"],
            "labels": res["labels"],
            "output_embedding": res["hs"],
        }
    outputs["track_instances"] = track_instances
    return outputs


# ------------------------- pure-JAX reference -------------------------------
def _reference_frame(x_nchw, params, orig_img_size):
    B, Cin, H, W = x_nchw.shape
    x = jnp.transpose(x_nchw, (0, 2, 3, 1)).reshape(B, H * W, Cin).astype(jnp.float32)
    D = params["w2"].shape[-1]
    feat = jnp.maximum(x @ params["w1"], 0.0)
    mem = feat @ params["w2"]
    q = params["query_embed"]
    att = jnp.einsum("qd,bsd->bqs", q, mem) / jnp.sqrt(jnp.float32(D))
    att = jax.nn.softmax(att, axis=-1)
    ctx = jnp.einsum("bqs,bsd->bqd", att, mem)
    hs = jnp.maximum(ctx @ params["w_ffn"], 0.0)
    logits = hs @ params["w_score"] + params["b_score"]
    pboxes = jax.nn.sigmoid(hs @ params["w_bbox"] + params["b_bbox"])
    prob = jax.nn.sigmoid(logits)
    scores = prob.max(-1)
    labels = prob.argmax(-1).astype(jnp.int32)
    cx, cy, w, h = pboxes[..., 0], pboxes[..., 1], pboxes[..., 2], pboxes[..., 3]
    xyxy = jnp.stack([cx - 0.5 * w, cy - 0.5 * h, cx + 0.5 * w, cy + 0.5 * h], -1)
    img_w, img_h = orig_img_size
    xyxy = xyxy * jnp.array([img_w, img_h, img_w, img_h], jnp.float32)
    return logits, pboxes, hs, xyxy, scores, labels


# --------------------------------- main --------------------------------------
if __name__ == "__main__":
    B, Cin, H, W = 2, 4, 16, 16
    D, Q, NC = 32, 8, 8            # hidden_dim, num_queries, num_classes
    T = 2                          # number of frames

    key = jax.random.PRNGKey(0)
    ks = jax.random.split(key, 10)
    params = {
        "w1": jax.random.normal(ks[0], (Cin, D), jnp.float32) * 0.1,
        "w2": jax.random.normal(ks[1], (D, D), jnp.float32) * 0.1,
        "query_embed": jax.random.normal(ks[2], (Q, D), jnp.float32) * 0.1,
        "w_ffn": jax.random.normal(ks[3], (D, D), jnp.float32) * 0.1,
        "w_score": jax.random.normal(ks[4], (D, NC), jnp.float32) * 0.1,
        "b_score": jax.random.normal(ks[5], (1, NC), jnp.float32) * 0.1,
        "w_bbox": jax.random.normal(ks[6], (D, 4), jnp.float32) * 0.1,
        "b_bbox": jax.random.normal(ks[7], (1, 4), jnp.float32) * 0.1,
    }
    frames = [jax.random.normal(ks[8 + t], (B, Cin, H, W), jnp.float32)
              for t in range(T)]
    orig_img_size = (640.0, 480.0)

    out = rtdetr_mot_forward(frames, params, orig_img_size)
    out = jax.block_until_ready(out)

    # correctness check against a pure-JAX reference (last frame)
    r_logits, r_pboxes, r_hs, r_boxes, r_scores, r_labels = _reference_frame(
        frames[-1], params, orig_img_size)
    ti = out["track_instances"]
    assert jnp.allclose(out["pred_logits"][-1], r_logits, atol=1e-3)
    assert jnp.allclose(out["pred_boxes"][-1], r_pboxes, atol=1e-3)
    assert jnp.allclose(ti["output_embedding"], r_hs, atol=1e-3)
    assert jnp.allclose(ti["boxes"], r_boxes, atol=1e-2)
    assert jnp.allclose(ti["scores"], r_scores, atol=1e-3)
    assert jnp.array_equal(ti["labels"], r_labels)

    print("KERNEL_OK")
</pallas_src>

<mosaic_0001>
module attributes {stable_mosaic.version = 11 : i64} {
  func.func @kernel(%arg0: memref<512x4xf32, #tpu.memory_space<vmem>>, %arg1: memref<4x32xf32, #tpu.memory_space<vmem>>, %arg2: memref<32x32xf32, #tpu.memory_space<vmem>>, %arg3: memref<8x32xf32, #tpu.memory_space<vmem>>, %arg4: memref<32x32xf32, #tpu.memory_space<vmem>>, %arg5: memref<32x12xf32, #tpu.memory_space<vmem>>, %arg6: memref<1x12xf32, #tpu.memory_space<vmem>>, %arg7: memref<4x4xf32, #tpu.memory_space<vmem>>, %arg8: memref<96x128xf32, #tpu.memory_space<vmem>>) attributes {dimension_semantics = [], scalar_prefetch = 0 : i64, scratch_operands = 0 : i64, tpu.core_type = #tpu.core_type<tc>} {
    %c0 = arith.constant 0 : index
    %c0_0 = arith.constant 0 : index
    %0 = vector.load %arg0[%c0, %c0_0] : memref<512x4xf32, #tpu.memory_space<vmem>>, vector<512x4xf32>
    %c0_1 = arith.constant 0 : index
    %c0_2 = arith.constant 0 : index
    %1 = vector.load %arg1[%c0_1, %c0_2] : memref<4x32xf32, #tpu.memory_space<vmem>>, vector<4x32xf32>
    %cst = arith.constant dense<0.000000e+00> : vector<512x32xf32>
    %2 = tpu.matmul %0, %1, %cst {dimension_numbers = #tpu.dot_dimension_numbers<[1], [0], [0], [1], [0, 0, 1, 1], [], []>} : vector<512x4xf32>, vector<4x32xf32>, vector<512x32xf32> -> vector<512x32xf32>
    %cst_3 = arith.constant 0.000000e+00 : f32
    %3 = vector.broadcast %cst_3 : f32 to vector<512x32xf32>
    %4 = arith.maximumf %2, %3 : vector<512x32xf32>
    %c0_4 = arith.constant 0 : index
    %c0_5 = arith.constant 0 : index
    %5 = vector.load %arg2[%c0_4, %c0_5] : memref<32x32xf32, #tpu.memory_space<vmem>>, vector<32x32xf32>
    %cst_6 = arith.constant dense<0.000000e+00> : vector<512x32xf32>
    %6 = tpu.matmul %4, %5, %cst_6 {dimension_numbers = #tpu.dot_dimension_numbers<[1], [0], [0], [1], [0, 0, 1, 1], [], []>} : vector<512x32xf32>, vector<32x32xf32>, vector<512x32xf32> -> vector<512x32xf32>
    %c0_7 = arith.constant 0 : index
    %c0_8 = arith.constant 0 : index
    %7 = vector.load %arg3[%c0_7, %c0_8] : memref<8x32xf32, #tpu.memory_space<vmem>>, vector<8x32xf32>
    %8 = vector.extract_strided_slice %6 {offsets = [0, 0], sizes = [256, 32], strides = [1, 1]} : vector<512x32xf32> to vector<256x32xf32>
    %cst_9 = arith.constant dense<0.000000e+00> : vector<8x256xf32>
    %9 = tpu.matmul %7, %8, %cst_9 {dimension_numbers = #tpu.dot_dimension_numbers<[1], [1], [0], [0], [0, 0, 1, 0], [], []>} : vector<8x32xf32>, vector<256x32xf32>, vector<8x256xf32> -> vector<8x256xf32>
    %cst_10 = arith.constant 0.176776692 : f32
    %10 = vector.broadcast %cst_10 : f32 to vector<8x256xf32>
    %11 = arith.mulf %9, %10 : vector<8x256xf32>
    %cst_11 = arith.constant dense<0xFF800000> : vector<8xf32>
    %12 = vector.multi_reduction <maximumf>, %11, %cst_11 [1] : vector<8x256xf32> to vector<8xf32>
    %13 = vector.shape_cast %12 : vector<8xf32> to vector<8x1xf32>
    %14 = vector.broadcast %13 : vector<8x1xf32> to vector<8x256xf32>
    %15 = arith.subf %11, %14 : vector<8x256xf32>
    %16 = math.exp %15 : vector<8x256xf32>
    %cst_12 = arith.constant dense<0.000000e+00> : vector<8xf32>
    %17 = vector.multi_reduction <add>, %16, %cst_12 [1] : vector<8x256xf32> to vector<8xf32>
    %18 = vector.shape_cast %17 : vector<8xf32> to vector<8x1xf32>
    %19 = tpu.reciprocal %18 {approx = true} : vector<8x1xf32> -> vector<8x1xf32>
    %20 = vector.broadcast %19 : vector<8x1xf32> to vector<8x256xf32>
    %21 = arith.mulf %16, %20 : vector<8x256xf32>
    %cst_13 = arith.constant dense<0.000000e+00> : vector<8x32xf32>
    %22 = tpu.matmul %21, %8, %cst_13 {dimension_numbers = #tpu.dot_dimension_numbers<[1], [0], [0], [1], [0, 0, 1, 1], [], []>} : vector<8x256xf32>, vector<256x32xf32>, vector<8x32xf32> -> vector<8x32xf32>
    %c0_14 = arith.constant 0 : index
    %c0_15 = arith.constant 0 : index
    %23 = vector.load %arg4[%c0_14, %c0_15] : memref<32x32xf32, #tpu.memory_space<vmem>>, vector<32x32xf32>
    %cst_16 = arith.constant dense<0.000000e+00> : vector<8x32xf32>
    %24 = tpu.matmul %22, %23, %cst_16 {dimension_numbers = #tpu.dot_dimension_numbers<[1], [0], [0], [1], [0, 0, 1, 1], [], []>} : vector<8x32xf32>, vector<32x32xf32>, vector<8x32xf32> -> vector<8x32xf32>
    %cst_17 = arith.constant 0.000000e+00 : f32
    %25 = vector.broadcast %cst_17 : f32 to vector<8x32xf32>
    %26 = arith.maximumf %24, %25 : vector<8x32xf32>
    %27 = vector.extract_strided_slice %6 {offsets = [256, 0], sizes = [256, 32], strides = [1, 1]} : vector<512x32xf32> to vector<256x32xf32>
    %cst_18 = arith.constant dense<0.000000e+00> : vector<8x256xf32>
    %28 = tpu.matmul %7, %27, %cst_18 {dimension_numbers = #tpu.dot_dimension_numbers<[1], [1], [0], [0], [0, 0, 1, 0], [], []>} : vector<8x32xf32>, vector<256x32xf32>, vector<8x256xf32> -> vector<8x256xf32>
    %cst_19 = arith.constant 0.176776692 : f32
    %29 = vector.broadcast %cst_19 : f32 to vector<8x256xf32>
    %30 = arith.mulf %28, %29 : vector<8x256xf32>
    %cst_20 = arith.constant dense<0xFF800000> : vector<8xf32>
    %31 = vector.multi_reduction <maximumf>, %30, %cst_20 [1] : vector<8x256xf32> to vector<8xf32>
    %32 = vector.shape_cast %31 : vector<8xf32> to vector<8x1xf32>
    %33 = vector.broadcast %32 : vector<8x1xf32> to vector<8x256xf32>
    %34 = arith.subf %30, %33 : vector<8x256xf32>
    %35 = math.exp %34 : vector<8x256xf32>
    %cst_21 = arith.constant dense<0.000000e+00> : vector<8xf32>
    %36 = vector.multi_reduction <add>, %35, %cst_21 [1] : vector<8x256xf32> to vector<8xf32>
    %37 = vector.shape_cast %36 : vector<8xf32> to vector<8x1xf32>
    %38 = tpu.reciprocal %37 {approx = true} : vector<8x1xf32> -> vector<8x1xf32>
    %39 = vector.broadcast %38 : vector<8x1xf32> to vector<8x256xf32>
    %40 = arith.mulf %35, %39 : vector<8x256xf32>
    %cst_22 = arith.constant dense<0.000000e+00> : vector<8x32xf32>
    %41 = tpu.matmul %40, %27, %cst_22 {dimension_numbers = #tpu.dot_dimension_numbers<[1], [0], [0], [1], [0, 0, 1, 1], [], []>} : vector<8x256xf32>, vector<256x32xf32>, vector<8x32xf32> -> vector<8x32xf32>
    %c0_23 = arith.constant 0 : index
    %c0_24 = arith.constant 0 : index
    %42 = vector.load %arg4[%c0_23, %c0_24] : memref<32x32xf32, #tpu.memory_space<vmem>>, vector<32x32xf32>
    %cst_25 = arith.constant dense<0.000000e+00> : vector<8x32xf32>
    %43 = tpu.matmul %41, %42, %cst_25 {dimension_numbers = #tpu.dot_dimension_numbers<[1], [0], [0], [1], [0, 0, 1, 1], [], []>} : vector<8x32xf32>, vector<32x32xf32>, vector<8x32xf32> -> vector<8x32xf32>
    %cst_26 = arith.constant 0.000000e+00 : f32
    %44 = vector.broadcast %cst_26 : f32 to vector<8x32xf32>
    %45 = arith.maximumf %43, %44 : vector<8x32xf32>
    %46 = tpu.concatenate %26, %45 in 0 : vector<8x32xf32>, vector<8x32xf32> -> vector<16x32xf32>
    %c0_27 = arith.constant 0 : index
    %c0_28 = arith.constant 0 : index
    %47 = vector.load %arg5[%c0_27, %c0_28] : memref<32x12xf32, #tpu.memory_space<vmem>>, vector<32x12xf32>
    %cst_29 = arith.constant dense<0.000000e+00> : vector<16x12xf32>
    %48 = tpu.matmul %46, %47, %cst_29 {dimension_numbers = #tpu.dot_dimension_numbers<[1], [0], [0], [1], [0, 0, 1, 1], [], []>} : vector<16x32xf32>, vector<32x12xf32>, vector<16x12xf32> -> vector<16x12xf32>
    %c0_30 = arith.constant 0 : index
    %c0_31 = arith.constant 0 : index
    %49 = vector.load %arg6[%c0_30, %c0_31] : memref<1x12xf32, #tpu.memory_space<vmem>>, vector<1x12xf32>
    %50 = vector.broadcast %49 : vector<1x12xf32> to vector<16x12xf32>
    %51 = arith.addf %48, %50 : vector<16x12xf32>
    %52 = vector.extract_strided_slice %51 {offsets = [0, 0], sizes = [16, 8], strides = [1, 1]} : vector<16x12xf32> to vector<16x8xf32>
    %53 = vector.extract_strided_slice %51 {offsets = [0, 8], sizes = [16, 4], strides = [1, 1]} : vector<16x12xf32> to vector<16x4xf32>
    %54 = arith.negf %53 : vector<16x4xf32>
    %55 = math.exp %54 : vector<16x4xf32>
    %cst_32 = arith.constant 1.000000e+00 : f32
    %56 = vector.broadcast %cst_32 : f32 to vector<16x4xf32>
    %57 = arith.addf %56, %55 : vector<16x4xf32>
    %58 = arith.divf %56, %57 : vector<16x4xf32>
    %59 = arith.negf %52 : vector<16x8xf32>
    %60 = math.exp %59 : vector<16x8xf32>
    %cst_33 = arith.constant 1.000000e+00 : f32
    %61 = vector.broadcast %cst_33 : f32 to vector<16x8xf32>
    %62 = arith.addf %61, %60 : vector<16x8xf32>
    %63 = arith.divf %61, %62 : vector<16x8xf32>
    %cst_34 = arith.constant dense<0xFF800000> : vector<16xf32>
    %64 = vector.multi_reduction <maximumf>, %63, %cst_34 [1] : vector<16x8xf32> to vector<16xf32>
    %65 = vector.shape_cast %64 : vector<16xf32> to vector<16x1xf32>
    %66 = tpu.iota {dimensions = array<i32: 1>} : vector<16x8xi32>
    %67 = vector.broadcast %65 : vector<16x1xf32> to vector<16x8xf32>
    %68 = arith.cmpf oeq, %63, %67 : vector<16x8xf32>
    %c8_i32 = arith.constant 8 : i32
    %69 = vector.broadcast %c8_i32 : i32 to vector<16x8xi32>
    %70 = arith.select %68, %66, %69 : vector<16x8xi1>, vector<16x8xi32>
    %cst_35 = arith.constant dense<2147483647> : vector<16xi32>
    %71 = vector.multi_reduction <minsi>, %70, %cst_35 [1] : vector<16x8xi32> to vector<16xi32>
    %72 = vector.shape_cast %71 : vector<16xi32> to vector<16x1xi32>
    %73 = arith.sitofp %72 : vector<16x1xi32> to vector<16x1xf32>
    %c0_36 = arith.constant 0 : index
    %c0_37 = arith.constant 0 : index
    %74 = vector.load %arg7[%c0_36, %c0_37] : memref<4x4xf32, #tpu.memory_space<vmem>>, vector<4x4xf32>
    %cst_38 = arith.constant dense<0.000000e+00> : vector<16x4xf32>
    %75 = tpu.matmul %58, %74, %cst_38 {dimension_numbers = #tpu.dot_dimension_numbers<[1], [0], [0], [1], [0, 0, 1, 1], [], []>} : vector<16x4xf32>, vector<4x4xf32>, vector<16x4xf32> -> vector<16x4xf32>
    %cst_39 = arith.constant 0.000000e+00 : f32
    %76 = vector.broadcast %cst_39 : f32 to vector<96x128xf32>
    %c0_40 = arith.constant 0 : index
    %c0_41 = arith.constant 0 : index
    %77 = vector.load %arg8[%c0_40, %c0_41] : memref<96x128xf32, #tpu.memory_space<vmem>>, vector<96x128xf32>
    tpu.vector_store %arg8[%c0_40, %c0_41], %76 {strides = array<i32>} : memref<96x128xf32, #tpu.memory_space<vmem>>, vector<96x128xf32>,
    %c0_42 = arith.constant 0 : index
    %c0_43 = arith.constant 0 : index
    %78 = vector.load %arg8[%c0_42, %c0_43] : memref<96x128xf32, #tpu.memory_space<vmem>>, vector<16x8xf32>
    tpu.vector_store %arg8[%c0_42, %c0_43], %52 {strides = array<i32>} : memref<96x128xf32, #tpu.memory_space<vmem>>, vector<16x8xf32>,
    %c16 = arith.constant 16 : index
    %c0_44 = arith.constant 0 : index
    %79 = vector.load %arg8[%c16, %c0_44] : memref<96x128xf32, #tpu.memory_space<vmem>>, vector<16x4xf32>
    tpu.vector_store %arg8[%c16, %c0_44], %58 {strides = array<i32>} : memref<96x128xf32, #tpu.memory_space<vmem>>, vector<16x4xf32>,
    %c32 = arith.constant 32 : index
    %c0_45 = arith.constant 0 : index
    %80 = vector.load %arg8[%c32, %c0_45] : memref<96x128xf32, #tpu.memory_space<vmem>>, vector<16x4xf32>
    tpu.vector_store %arg8[%c32, %c0_45], %75 {strides = array<i32>} : memref<96x128xf32, #tpu.memory_space<vmem>>, vector<16x4xf32>,
    %c48 = arith.constant 48 : index
    %c0_46 = arith.constant 0 : index
    %81 = vector.load %arg8[%c48, %c0_46] : memref<96x128xf32, #tpu.memory_space<vmem>>, vector<16x1xf32>
    tpu.vector_store %arg8[%c48, %c0_46], %65 {strides = array<i32>} : memref<96x128xf32, #tpu.memory_space<vmem>>, vector<16x1xf32>,
    %c64 = arith.constant 64 : index
    %c0_47 = arith.constant 0 : index
    %82 = vector.load %arg8[%c64, %c0_47] : memref<96x128xf32, #tpu.memory_space<vmem>>, vector<16x1xf32>
    tpu.vector_store %arg8[%c64, %c0_47], %73 {strides = array<i32>} : memref<96x128xf32, #tpu.memory_space<vmem>>, vector<16x1xf32>,
    %c80 = arith.constant 80 : index
    %c0_48 = arith.constant 0 : index
    %83 = vector.load %arg8[%c80, %c0_48] : memref<96x128xf32, #tpu.memory_space<vmem>>, vector<16x32xf32>
    tpu.vector_store %arg8[%c80, %c0_48], %46 {strides = array<i32>} : memref<96x128xf32, #tpu.memory_space<vmem>>, vector<16x32xf32>,
    return
  }
}

</mosaic_0001>

<llo_original>
// kernel: tpu_custom_call.1
$region0: #{tpu_custom_call.1}
  #allocation0 [shape = 'u32[]', space=smem, size = 0x4, offset = 0x4, fixed_abs, tag = 'smem constant byte address 0x4 - core index']
  #allocation1 [shape = 'u32[144,128]{1,0:T(1,128)}', space=vmem, size = 0x12000, scoped, tag = 'internal scratch']
  %s0 = inlined_call_operand.vmem [shape: f32[512,4], index: 0, kind: input, shape index: {}]
  %s1 = inlined_call_operand.vmem [shape: f32[4,32], index: 1, kind: input, shape index: {}]
  %s2 = inlined_call_operand.vmem [shape: f32[32,32], index: 2, kind: input, shape index: {}]
  %s3 = inlined_call_operand.vmem [shape: f32[8,32], index: 3, kind: input, shape index: {}]
  %s4 = inlined_call_operand.vmem [shape: f32[32,32], index: 4, kind: input, shape index: {}]
  %s5 = inlined_call_operand.vmem [shape: f32[32,12], index: 5, kind: input, shape index: {}]
  %s6 = inlined_call_operand.vmem [shape: f32[1,12], index: 6, kind: input, shape index: {}]
  %s7 = inlined_call_operand.vmem [shape: f32[4,4], index: 7, kind: input, shape index: {}]
  %s8 = inlined_call_operand.hbm [shape: f32[96,128], index: 8, kind: output, shape index: {}]
  %s9 = sld [smem:[#allocation0]]
  $region42: #{tpu_custom_call.1} parent=0
    _
  %s11 = ssub.s32 1, %s9
  %s12 = scalar_select 0, %s11, %s9
  $region1: #{tpu_custom_call.1} parent=0
    #allocation2 [shape = 'u8[49152]{0}', space=vmem, size = 0xc000, scoped, tag = 'output window, operand 0, single buffered']
    #allocation3 [shape = 's32[1]{0}', space=sflag, size = 0x4, scoped, tag = 'scoped memory for tpu_custom_call.1']
    %13 = vsyncpa [#allocation3], 0
    // Predicated region
    $region2: #{tpu_custom_call.1} parent=1 // pred_check
      _
    $region3: #{tpu_custom_call.1} parent=1 // pred_check_branch
      %15 = sbr.rel (0) target = $region5
    $region4: #{tpu_custom_call.1} parent=1 // pred_region
      _
    $region5: #{tpu_custom_call.1} parent=1 // pred_fallthru
      _
    // Predicated region
    $region6: #{tpu_custom_call.1} parent=1 // pred_check
      _
    $region7: #{tpu_custom_call.1} parent=1 // pred_check_branch
      %17 = sbr.rel (0) target = $region9
    $region8: #{tpu_custom_call.1} parent=1 // pred_region
      _
    $region9: #{tpu_custom_call.1} parent=1 // pred_fallthru
      _
    // Predicated region
    $region10: #{tpu_custom_call.1} parent=1 // pred_check
      _
    $region11: #{tpu_custom_call.1} parent=1 // pred_check_branch
      %19 = sbr.rel (0) target = $region13
    $region12: #{tpu_custom_call.1} parent=1 // pred_region
      _
    $region13: #{tpu_custom_call.1} parent=1 // pred_fallthru
      _
    // Predicated region
    $region14: #{tpu_custom_call.1} parent=1 // pred_check
      _
    $region15: #{tpu_custom_call.1} parent=1 // pred_check_branch
      %21 = sbr.rel (0) target = $region17
    $region16: #{tpu_custom_call.1} parent=1 // pred_region
      _
    $region17: #{tpu_custom_call.1} parent=1 // pred_fallthru
      _
    // Predicated region
    $region18: #{tpu_custom_call.1} parent=1 // pred_check
      _
    $region19: #{tpu_custom_call.1} parent=1 // pred_check_branch
      %23 = sbr.rel (0) target = $region21
    $region20: #{tpu_custom_call.1} parent=1 // pred_region
      _
    $region21: #{tpu_custom_call.1} parent=1 // pred_fallthru
      _
    // Predicated region
    $region22: #{tpu_custom_call.1} parent=1 // pred_check
      _
    $region23: #{tpu_custom_call.1} parent=1 // pred_check_branch
      %25 = sbr.rel (0) target = $region25
    $region24: #{tpu_custom_call.1} parent=1 // pred_region
      _
    $region25: #{tpu_custom_call.1} parent=1 // pred_fallthru
      _
    // Predicated region
    $region26: #{tpu_custom_call.1} parent=1 // pred_check
      _
    $region27: #{tpu_custom_call.1} parent=1 // pred_check_branch
      %27 = sbr.rel (0) target = $region29
    $region28: #{tpu_custom_call.1} parent=1 // pred_region
      _
    $region29: #{tpu_custom_call.1} parent=1 // pred_fallthru
      _
    // Predicated region
    $region30: #{tpu_custom_call.1} parent=1 // pred_check
      _
    $region31: #{tpu_custom_call.1} parent=1 // pred_check_branch
      %29 = sbr.rel (0) target = $region33
    $region32: #{tpu_custom_call.1} parent=1 // pred_region
      _
    $region33: #{tpu_custom_call.1} parent=1 // pred_fallthru
      _
    %v30 = vld [vmem:[%s0] sm:$0xff]
    %v31 = vld [vmem:[%s0 + $0x8] sm:$0xff]
    %v32 = vld [vmem:[%s0 + $0x10] sm:$0xff]
    %v33 = vld [vmem:[%s0 + $0x18] sm:$0xff]
    %v34 = vld [vmem:[%s0 + $0x20] sm:$0xff]
    %v35 = vld [vmem:[%s0 + $0x28] sm:$0xff]
    %v36 = vld [vmem:[%s0 + $0x30] sm:$0xff]
    %v37 = vld [vmem:[%s0 + $0x38] sm:$0xff]
    %v38 = vld [vmem:[%s0 + $0x40] sm:$0xff]
    %v39 = vld [vmem:[%s0 + $0x48] sm:$0xff]
    %v40 = vld [vmem:[%s0 + $0x50] sm:$0xff]
    %v41 = vld [vmem:[%s0 + $0x58] sm:$0xff]
    %v42 = vld [vmem:[%s0 + $0x60] sm:$0xff]
    %v43 = vld [vmem:[%s0 + $0x68] sm:$0xff]
    %v44 = vld [vmem:[%s0 + $0x70] sm:$0xff]
    %v45 = vld [vmem:[%s0 + $0x78] sm:$0xff]
    %v46 = vld [vmem:[%s0 + $0x80] sm:$0xff]
    %v47 = vld [vmem:[%s0 + $0x88] sm:$0xff]
    %v48 = vld [vmem:[%s0 + $0x90] sm:$0xff]
    %v49 = vld [vmem:[%s0 + $0x98] sm:$0xff]
    %v50 = vld [vmem:[%s0 + $0xa0] sm:$0xff]
    %v51 = vld [vmem:[%s0 + $0xa8] sm:$0xff]
    %v52 = vld [vmem:[%s0 + $0xb0] sm:$0xff]
    %v53 = vld [vmem:[%s0 + $0xb8] sm:$0xff]
    %v54 = vld [vmem:[%s0 + $0xc0] sm:$0xff]
    %v55 = vld [vmem:[%s0 + $0xc8] sm:$0xff]
    %v56 = vld [vmem:[%s0 + $0xd0] sm:$0xff]
    %v57 = vld [vmem:[%s0 + $0xd8] sm:$0xff]
    %v58 = vld [vmem:[%s0 + $0xe0] sm:$0xff]
    %v59 = vld [vmem:[%s0 + $0xe8] sm:$0xff]
    %v60 = vld [vmem:[%s0 + $0xf0] sm:$0xff]
    %v61 = vld [vmem:[%s0 + $0xf8] sm:$0xff]
    %v62 = vld [vmem:[%s0 + $0x100] sm:$0xff]
    %v63 = vld [vmem:[%s0 + $0x108] sm:$0xff]
    %v64 = vld [vmem:[%s0 + $0x110] sm:$0xff]
    %v65 = vld [vmem:[%s0 + $0x118] sm:$0xff]
    %v66 = vld [vmem:[%s0 + $0x120] sm:$0xff]
    %v67 = vld [vmem:[%s0 + $0x128] sm:$0xff]
    %v68 = vld [vmem:[%s0 + $0x130] sm:$0xff]
    %v69 = vld [vmem:[%s0 + $0x138] sm:$0xff]
    %v70 = vld [vmem:[%s0 + $0x140] sm:$0xff]
    %v71 = vld [vmem:[%s0 + $0x148] sm:$0xff]
    %v72 = vld [vmem:[%s0 + $0x150] sm:$0xff]
    %v73 = vld [vmem:[%s0 + $0x158] sm:$0xff]
    %v74 = vld [vmem:[%s0 + $0x160] sm:$0xff]
    %v75 = vld [vmem:[%s0 + $0x168] sm:$0xff]
    %v76 = vld [vmem:[%s0 + $0x170] sm:$0xff]
    %v77 = vld [vmem:[%s0 + $0x178] sm:$0xff]
    %v78 = vld [vmem:[%s0 + $0x180] sm:$0xff]
    %v79 = vld [vmem:[%s0 + $0x188] sm:$0xff]
    %v80 = vld [vmem:[%s0 + $0x190] sm:$0xff]
    %v81 = vld [vmem:[%s0 + $0x198] sm:$0xff]
    %v82 = vld [vmem:[%s0 + $0x1a0] sm:$0xff]
    %v83 = vld [vmem:[%s0 + $0x1a8] sm:$0xff]
    %v84 = vld [vmem:[%s0 + $0x1b0] sm:$0xff]
    %v85 = vld [vmem:[%s0 + $0x1b8] sm:$0xff]
    %v86 = vld [vmem:[%s0 + $0x1c0] sm:$0xff]
    %v87 = vld [vmem:[%s0 + $0x1c8] sm:$0xff]
    %v88 = vld [vmem:[%s0 + $0x1d0] sm:$0xff]
    %v89 = vld [vmem:[%s0 + $0x1d8] sm:$0xff]
    %v90 = vld [vmem:[%s0 + $0x1e0] sm:$0xff]
    %v91 = vld [vmem:[%s0 + $0x1e8] sm:$0xff]
    %v92 = vld [vmem:[%s0 + $0x1f0] sm:$0xff]
    %v93 = vld [vmem:[%s0 + $0x1f8] sm:$0xff]
    %v94 = vld [vmem:[%s1] sm:$0xf]
    %vm95 = vcmask 31744
    %v97 = vsel %vm95, %v30, 0
    %v100 = vsel %vm95, %v31, 0
    %v103 = vsel %vm95, %v32, 0
    %v106 = vsel %vm95, %v33, 0
    %v109 = vsel %vm95, %v34, 0
    %v112 = vsel %vm95, %v35, 0
    %v115 = vsel %vm95, %v36, 0
    %v118 = vsel %vm95, %v37, 0
    %v121 = vsel %vm95, %v38, 0
    %v124 = vsel %vm95, %v39, 0
    %v127 = vsel %vm95, %v40, 0
    %v130 = vsel %vm95, %v41, 0
    %v133 = vsel %vm95, %v42, 0
    %v136 = vsel %vm95, %v43, 0
    %v139 = vsel %vm95, %v44, 0
    %v142 = vsel %vm95, %v45, 0
    %v145 = vsel %vm95, %v46, 0
    %v148 = vsel %vm95, %v47, 0
    %v151 = vsel %vm95, %v48, 0
    %v154 = vsel %vm95, %v49, 0
    %v157 = vsel %vm95, %v50, 0
    %v160 = vsel %vm95, %v51, 0
    %v163 = vsel %vm95, %v52, 0
    %v166 = vsel %vm95, %v53, 0
    %v169 = vsel %vm95, %v54, 0
    %v172 = vsel %vm95, %v55, 0
    %v175 = vsel %vm95, %v56, 0
    %v178 = vsel %vm95, %v57, 0
    %v181 = vsel %vm95, %v58, 0
    %v184 = vsel %vm95, %v59, 0
    %v187 = vsel %vm95, %v60, 0
    %v190 = vsel %vm95, %v61, 0
    %v193 = vsel %vm95, %v62, 0
    %v196 = vsel %vm95, %v63, 0
    %v199 = vsel %vm95, %v64, 0
    %v202 = vsel %vm95, %v65, 0
    %v205 = vsel %vm95, %v66, 0
    %v208 = vsel %vm95, %v67, 0
    %v211 = vsel %vm95, %v68, 0
    %v214 = vsel %vm95, %v69, 0
    %v217 = vsel %vm95, %v70, 0
    %v220 = vsel %vm95, %v71, 0
    %v223 = vsel %vm95, %v72, 0
    %v226 = vsel %vm95, %v73, 0
    %v229 = vsel %vm95, %v74, 0
    %v232 = vsel %vm95, %v75, 0
    %v235 = vsel %vm95, %v76, 0
    %v238 = vsel %vm95, %v77, 0
    %v241 = vsel %vm95, %v78, 0
    %v244 = vsel %vm95, %v79, 0
    %v247 = vsel %vm95, %v80, 0
    %v250 = vsel %vm95, %v81, 0
    %v253 = vsel %vm95, %v82, 0
    %v256 = vsel %vm95, %v83, 0
    %v259 = vsel %vm95, %v84, 0
    %v262 = vsel %vm95, %v85, 0
    %v265 = vsel %vm95, %v86, 0
    %v268 = vsel %vm95, %v87, 0
    %v271 = vsel %vm95, %v88, 0
    %v274 = vsel %vm95, %v89, 0
    %v277 = vsel %vm95, %v90, 0
    %v280 = vsel %vm95, %v91, 0
    %v283 = vsel %vm95, %v92, 0
    %v286 = vsel %vm95, %v93, 0
    %vm288 = vcmask 1043456
    %v290 = vsel %vm288, %v94, 0
    %292 = vmatprep.subr.mxu0 0.0
    %293 = vmatpush1.msra.mxu0 %v290
    %294 = vmatprep.subr.mxu0 0.0
    %295 = vmatpush1.msra.mxu0 0.0
    %296 = vmatprep.subr.mxu0 0.0
    %297 = vmatpush1.msra.mxu0 0.0
    %298 = vmatprep.subr.mxu0 0.0
    %299 = vmatpush1.msra.mxu0 0.0
    %300 = vmatprep.subr.mxu0 0.0
    %301 = vmatpush1.msra.mxu0 0.0
    %302 = vmatprep.subr.mxu0 0.0
    %303 = vmatpush1.msra.mxu0 0.0
    %304 = vmatprep.subr.mxu0 0.0
    %305 = vmatpush1.msra.mxu0 0.0
    %306 = vmatprep.subr.mxu0 0.0
    %307 = vmatpush1.msra.mxu0 0.0
    %308 = vmatprep.subr.mxu0 0.0
    %309 = vmatpush1.msra.mxu0 0.0
    %310 = vmatprep.subr.mxu0 0.0
    %311 = vmatpush1.msra.mxu0 0.0
    %312 = vmatprep.subr.mxu0 0.0
    %313 = vmatpush1.msra.mxu0 0.0
    %314 = vmatprep.subr.mxu0 0.0
    %315 = vmatpush1.msra.mxu0 0.0
    %316 = vmatprep.subr.mxu0 0.0
    %317 = vmatpush1.msra.mxu0 0.0
    %318 = vmatprep.subr.mxu0 0.0
    %319 = vmatpush1.msra.mxu0 0.0
    %320 = vmatprep.subr.mxu0 0.0
    %321 = vmatpush1.msra.mxu0 0.0
    %322 = vmatprep.subr.mxu0 0.0
    %323 = vmatpush1.msra.mxu0 0.0
    %324 = vmatprep.subr.mxu0 0.0
    %325 = vmatpush1.msra.mxu0 0.0
    %326 = vmatprep.subr.mxu0 0.0
    %327 = vmatpush1.msra.mxu0 0.0
    %328 = vmatprep.subr.mxu0 0.0
    %329 = vmatpush1.msra.mxu0 0.0
    %330 = vmatprep.subr.mxu0 0.0
    %331 = vmatpush1.msra.mxu0 0.0
    %332 = vmatprep.subr.mxu0 0.0
    %333 = vmatpush1.msra.mxu0 0.0
    %334 = vmatprep.subr.mxu0 0.0
    %335 = vmatpush1.msra.mxu0 0.0
    %336 = vmatprep.subr.mxu0 0.0
    %337 = vmatpush1.msra.mxu0 0.0
    %338 = vmatprep.subr.mxu0 0.0
    %339 = vmatpush1.msra.mxu0 0.0
    %340 = vmatprep.subr.mxu0 0.0
    %341 = vmatpush1.msra.mxu0 0.0
    %342 = vmatprep.subr.mxu0 0.0
    %343 = vmatpush1.msra.mxu0 0.0
    %344 = vmatprep.subr.mxu0 0.0
    %345 = vmatpush1.msra.mxu0 0.0
    %346 = vmatprep.subr.mxu0 0.0
    %347 = vmatpush1.msra.mxu0 0.0
    %348 = vmatprep.subr.mxu0 0.0
    %349 = vmatpush1.msra.mxu0 0.0
    %350 = vmatprep.subr.mxu0 0.0
    %351 = vmatpush1.msra.mxu0 0.0
    %352 = vmatprep.subr.mxu0 0.0
    %353 = vmatpush1.msra.mxu0 0.0
    %354 = vmatprep.subr.mxu0 0.0
    %355 = vmatpush1.msra.mxu0 0.0
    %356 = vmatprep.mubr.f32.mxu0 0.0
    %357 = vmatmul.mubr.f32.gmra.mrb[0].mxu0 %v97
    %v358 = vpop.f32.mrb[0].mxu0
    %v359 = vadd.f32 0.0, %v358
    %v360 = vpop.f32.mrb[0].mxu0
    %361 = vmatprep.mubr.f32.mxu0 0.0
    %362 = vmatmul.mubr.f32.gmra.mrb[0].mxu0 %v100
    %v363 = vpop.f32.mrb[0].mxu0
    %v364 = vadd.f32 0.0, %v363
    %v365 = vpop.f32.mrb[0].mxu0
    %366 = vmatprep.mubr.f32.mxu0 0.0
    %367 = vmatmul.mubr.f32.gmra.mrb[0].mxu0 %v103
    %v368 = vpop.f32.mrb[0].mxu0
    %v369 = vadd.f32 0.0, %v368
    %v370 = vpop.f32.mrb[0].mxu0
    %371 = vmatprep.mubr.f32.mxu0 0.0
    %372 = vmatmul.mubr.f32.gmra.mrb[0].mxu0 %v106
    %v373 = vpop.f32.mrb[0].mxu0
    %v374 = vadd.f32 0.0, %v373
    %v375 = vpop.f32.mrb[0].mxu0
    %376 = vmatprep.mubr.f32.mxu0 0.0
    %377 = vmatmul.mubr.f32.gmra.mrb[0].mxu0 %v109
    %v378 = vpop.f32.mrb[0].mxu0
    %v379 = vadd.f32 0.0, %v378
    %v380 = vpop.f32.mrb[0].mxu0
    %381 = vmatprep.mubr.f32.mxu0 0.0
    %382 = vmatmul.mubr.f32.gmra.mrb[0].mxu0 %v112
    %v383 = vpop.f32.mrb[0].mxu0
    %v384 = vadd.f32 0.0, %v383
    %v385 = vpop.f32.mrb[0].mxu0
    %386 = vmatprep.mubr.f32.mxu0 0.0
    %387 = vmatmul.mubr.f32.gmra.mrb[0].mxu0 %v115
    %v388 = vpop.f32.mrb[0].mxu0
    %v389 = vadd.f32 0.0, %v388
    %v390 = vpop.f32.mrb[0].mxu0
    %391 = vmatprep.mubr.f32.mxu0 0.0
    %392 = vmatmul.mubr.f32.gmra.mrb[0].mxu0 %v118
    %v393 = vpop.f32.mrb[0].mxu0
    %v394 = vadd.f32 0.0, %v393
    %v395 = vpop.f32.mrb[0].mxu0
    %396 = vmatprep.mubr.f32.mxu0 0.0
    %397 = vmatmul.mubr.f32.gmra.mrb[0].mxu0 %v121
    %v398 = vpop.f32.mrb[0].mxu0
    %v399 = vadd.f32 0.0, %v398
    %v400 = vpop.f32.mrb[0].mxu0
    %401 = vmatprep.mubr.f32.mxu0 0.0
    %402 = vmatmul.mubr.f32.gmra.mrb[0].mxu0 %v124
    %v403 = vpop.f32.mrb[0].mxu0
    %v404 = vadd.f32 0.0, %v403
    %v405 = vpop.f32.mrb[0].mxu0
    %406 = vmatprep.mubr.f32.mxu0 0.0
    %407 = vmatmul.mubr.f32.gmra.mrb[0].mxu0 %v127
    %v408 = vpop.f32.mrb[0].mxu0
    %v409 = vadd.f32 0.0, %v408
    %v410 = vpop.f32.mrb[0].mxu0
    %411 = vmatprep.mubr.f32.mxu0 0.0
    %412 = vmatmul.mubr.f32.gmra.mrb[0].mxu0 %v130
    %v413 = vpop.f32.mrb[0].mxu0
    %v414 = vadd.f32 0.0, %v413
    %v415 = vpop.f32.mrb[0].mxu0
    %416 = vmatprep.mubr.f32.mxu0 0.0
    %417 = vmatmul.mubr.f32.gmra.mrb[0].mxu0 %v133
    %v418 = vpop.f32.mrb[0].mxu0
    %v419 = vadd.f32 0.0, %v418
    %v420 = vpop.f32.mrb[0].mxu0
    %421 = vmatprep.mubr.f32.mxu0 0.0
    %422 = vmatmul.mubr.f32.gmra.mrb[0].mxu0 %v136
    %v423 = vpop.f32.mrb[0].mxu0
    %v424 = vadd.f32 0.0, %v423
    %v425 = vpop.f32.mrb[0].mxu0
    %426 = vmatprep.mubr.f32.mxu0 0.0
    %427 = vmatmul.mubr.f32.gmra.mrb[0].mxu0 %v139
    %v428 = vpop.f32.mrb[0].mxu0
    %v429 = vadd.f32 0.0, %v428
    %v430 = vpop.f32.mrb[0].mxu0
    %431 = vmatprep.mubr.f32.mxu0 0.0
    %432 = vmatmul.mubr.f32.gmra.mrb[0].mxu0 %v142
    %v433 = vpop.f32.mrb[0].mxu0
    %v434 = vadd.f32 0.0, %v433
    %v435 = vpop.f32.mrb[0].mxu0
    %436 = vmatprep.mubr.f32.mxu0 0.0
    %437 = vmatmul.mubr.f32.gmra.mrb[0].mxu0 %v145
    %v438 = vpop.f32.mrb[0].mxu0
    %v439 = vadd.f32 0.0, %v438
    %v440 = vpop.f32.mrb[0].mxu0
    %441 = vmatprep.mubr.f32.mxu0 0.0
    %442 = vmatmul.mubr.f32.gmra.mrb[0].mxu0 %v148
    %v443 = vpop.f32.mrb[0].mxu0
    %v444 = vadd.f32 0.0, %v443
    %v445 = vpop.f32.mrb[0].mxu0
    %446 = vmatprep.mubr.f32.mxu0 0.0
    %447 = vmatmul.mubr.f32.gmra.mrb[0].mxu0 %v151
    %v448 = vpop.f32.mrb[0].mxu0
    %v449 = vadd.f32 0.0, %v448
    %v450 = vpop.f32.mrb[0].mxu0
    %451 = vmatprep.mubr.f32.mxu0 0.0
    %452 = vmatmul.mubr.f32.gmra.mrb[0].mxu0 %v154
    %v453 = vpop.f32.mrb[0].mxu0
    %v454 = vadd.f32 0.0, %v453
    %v455 = vpop.f32.mrb[0].mxu0
    %456 = vmatprep.mubr.f32.mxu0 0.0
    %457 = vmatmul.mubr.f32.gmra.mrb[0].mxu0 %v157
    %v458 = vpop.f32.mrb[0].mxu0
    %v459 = vadd.f32 0.0, %v458
    %v460 = vpop.f32.mrb[0].mxu0
    %461 = vmatprep.mubr.f32.mxu0 0.0
    %462 = vmatmul.mubr.f32.gmra.mrb[0].mxu0 %v160
    %v463 = vpop.f32.mrb[0].mxu0
    %v464 = vadd.f32 0.0, %v463
    %v465 = vpop.f32.mrb[0].mxu0
    %466 = vmatprep.mubr.f32.mxu0 0.0
    %467 = vmatmul.mubr.f32.gmra.mrb[0].mxu0 %v163
    %v468 = vpop.f32.mrb[0].mxu0
    %v469 = vadd.f32 0.0, %v468
    %v470 = vpop.f32.mrb[0].mxu0
    %471 = vmatprep.mubr.f32.mxu0 0.0
    %472 = vmatmul.mubr.f32.gmra.mrb[0].mxu0 %v166
    %v473 = vpop.f32.mrb[0].mxu0
    %v474 = vadd.f32 0.0, %v473
    %v475 = vpop.f32.mrb[0].mxu0
    %476 = vmatprep.mubr.f32.mxu0 0.0
    %477 = vmatmul.mubr.f32.gmra.mrb[0].mxu0 %v169
    %v478 = vpop.f32.mrb[0].mxu0
    %v479 = vadd.f32 0.0, %v478
    %v480 = vpop.f32.mrb[0].mxu0
    %481 = vmatprep.mubr.f32.mxu0 0.0
    %482 = vmatmul.mubr.f32.gmra.mrb[0].mxu0 %v172
    %v483 = vpop.f32.mrb[0].mxu0
    %v484 = vadd.f32 0.0, %v483
    %v485 = vpop.f32.mrb[0].mxu0
    %486 = vmatprep.mubr.f32.mxu0 0.0
    %487 = vmatmul.mubr.f32.gmra.mrb[0].mxu0 %v175
    %v488 = vpop.f32.mrb[0].mxu0
    %v489 = vadd.f32 0.0, %v488
    %v490 = vpop.f32.mrb[0].mxu0
    %491 = vmatprep.mubr.f32.mxu0 0.0
    %492 = vmatmul.mubr.f32.gmra.mrb[0].mxu0 %v178
    %v493 = vpop.f32.mrb[0].mxu0
    %v494 = vadd.f32 0.0, %v493
    %v495 = vpop.f32.mrb[0].mxu0
    %496 = vmatprep.mubr.f32.mxu0 0.0
    %497 = vmatmul.mubr.f32.gmra.mrb[0].mxu0 %v181
    %v498 = vpop.f32.mrb[0].mxu0
    %v499 = vadd.f32 0.0, %v498
    %v500 = vpop.f32.mrb[0].mxu0
    %501 = vmatprep.mubr.f32.mxu0 0.0
    %502 = vmatmul.mubr.f32.gmra.mrb[0].mxu0 %v184
    %v503 = vpop.f32.mrb[0].mxu0
    %v504 = vadd.f32 0.0, %v503
    %v505 = vpop.f32.mrb[0].mxu0
    %506 = vmatprep.mubr.f32.mxu0 0.0
    %507 = vmatmul.mubr.f32.gmra.mrb[0].mxu0 %v187
    %v508 = vpop.f32.mrb[0].mxu0
    %v509 = vadd.f32 0.0, %v508
    %v510 = vpop.f32.mrb[0].mxu0
    %511 = vmatprep.mubr.f32.mxu0 0.0
    %512 = vmatmul.mubr.f32.gmra.mrb[0].mxu0 %v190
    %v513 = vpop.f32.mrb[0].mxu0
    %v514 = vadd.f32 0.0, %v513
    %v515 = vpop.f32.mrb[0].mxu0
    %516 = vmatprep.mubr.f32.mxu0 0.0
    %517 = vmatmul.mubr.f32.gmra.mrb[0].mxu0 %v193
    %v518 = vpop.f32.mrb[0].mxu0
    %v519 = vadd.f32 0.0, %v518
    %v520 = vpop.f32.mrb[0].mxu0
    %521 = vmatprep.mubr.f32.mxu0 0.0
    %522 = vmatmul.mubr.f32.gmra.mrb[0].mxu0 %v196
    %v523 = vpop.f32.mrb[0].mxu0
    %v524 = vadd.f32 0.0, %v523
    %v525 = vpop.f32.mrb[0].mxu0
    %526 = vmatprep.mubr.f32.mxu0 0.0
    %527 = vmatmul.mubr.f32.gmra.mrb[0].mxu0 %v199
    %v528 = vpop.f32.mrb[0].mxu0
    %v529 = vadd.f32 0.0, %v528
    %v530 = vpop.f32.mrb[0].mxu0
    %531 = vmatprep.mubr.f32.mxu0 0.0
    %532 = vmatmul.mubr.f32.gmra.mrb[0].mxu0 %v202
    %v533 = vpop.f32.mrb[0].mxu0
    %v534 = vadd.f32 0.0, %v533
    %v535 = vpop.f32.mrb[0].mxu0
    %536 = vmatprep.mubr.f32.mxu0 0.0
    %537 = vmatmul.mubr.f32.gmra.mrb[0].mxu0 %v205
    %v538 = vpop.f32.mrb[0].mxu0
    %v539 = vadd.f32 0.0, %v538
    %v540 = vpop.f32.mrb[0].mxu0
    %541 = vmatprep.mubr.f32.mxu0 0.0
    %542 = vmatmul.mubr.f32.gmra.mrb[0].mxu0 %v208
    %v543 = vpop.f32.mrb[0].mxu0
    %v544 = vadd.f32 0.0, %v543
    %v545 = vpop.f32.mrb[0].mxu0
    %546 = vmatprep.mubr.f32.mxu0 0.0
    %547 = vmatmul.mubr.f32.gmra.mrb[0].mxu0 %v211
    %v548 = vpop.f32.mrb[0].mxu0
    %v549 = vadd.f32 0.0, %v548
    %v550 = vpop.f32.mrb[0].mxu0
    %551 = vmatprep.mubr.f32.mxu0 0.0
    %552 = vmatmul.mubr.f32.gmra.mrb[0].mxu0 %v214
    %v553 = vpop.f32.mrb[0].mxu0
    %v554 = vadd.f32 0.0, %v553
    %v555 = vpop.f32.mrb[0].mxu0
    %556 = vmatprep.mubr.f32.mxu0 0.0
    %557 = vmatmul.mubr.f32.gmra.mrb[0].mxu0 %v217
    %v558 = vpop.f32.mrb[0].mxu0
    %v559 = vadd.f32 0.0, %v558
    %v560 = vpop.f32.mrb[0].mxu0
    %561 = vmatprep.mubr.f32.mxu0 0.0
    %562 = vmatmul.mubr.f32.gmra.mrb[0].mxu0 %v220
    %v563 = vpop.f32.mrb[0].mxu0
    %v564 = vadd.f32 0.0, %v563
    %v565 = vpop.f32.mrb[0].mxu0
    %566 = vmatprep.mubr.f32.mxu0 0.0
    %567 = vmatmul.mubr.f32.gmra.mrb[0].mxu0 %v223
    %v568 = vpop.f32.mrb[0].mxu0
    %v569 = vadd.f32 0.0, %v568
    %v570 = vpop.f32.mrb[0].mxu0
    %571 = vmatprep.mubr.f32.mxu0 0.0
    %572 = vmatmul.mubr.f32.gmra.mrb[0].mxu0 %v226
    %v573 = vpop.f32.mrb[0].mxu0
    %v574 = vadd.f32 0.0, %v573
    %v575 = vpop.f32.mrb[0].mxu0
    %576 = vmatprep.mubr.f32.mxu0 0.0
    %577 = vmatmul.mubr.f32.gmra.mrb[0].mxu0 %v229
    %v578 = vpop.f32.mrb[0].mxu0
    %v579 = vadd.f32 0.0, %v578
    %v580 = vpop.f32.mrb[0].mxu0
    %581 = vmatprep.mubr.f32.mxu0 0.0
    %582 = vmatmul.mubr.f32.gmra.mrb[0].mxu0 %v232
    %v583 = vpop.f32.mrb[0].mxu0
    %v584 = vadd.f32 0.0, %v583
    %v585 = vpop.f32.mrb[0].mxu0
    %586 = vmatprep.mubr.f32.mxu0 0.0
    %587 = vmatmul.mubr.f32.gmra.mrb[0].mxu0 %v235
    %v588 = vpop.f32.mrb[0].mxu0
    %v589 = vadd.f32 0.0, %v588
    %v590 = vpop.f32.mrb[0].mxu0
    %591 = vmatprep.mubr.f32.mxu0 0.0
    %592 = vmatmul.mubr.f32.gmra.mrb[0].mxu0 %v238
    %v593 = vpop.f32.mrb[0].mxu0
    %v594 = vadd.f32 0.0, %v593
    %v595 = vpop.f32.mrb[0].mxu0
    %596 = vmatprep.mubr.f32.mxu0 0.0
    %597 = vmatmul.mubr.f32.gmra.mrb[0].mxu0 %v241
    %v598 = vpop.f32.mrb[0].mxu0
    %v599 = vadd.f32 0.0, %v598
    %v600 = vpop.f32.mrb[0].mxu0
    %601 = vmatprep.mubr.f32.mxu0 0.0
    %602 = vmatmul.mubr.f32.gmra.mrb[0].mxu0 %v244
    %v603 = vpop.f32.mrb[0].mxu0
    %v604 = vadd.f32 0.0, %v603
    %v605 = vpop.f32.mrb[0].mxu0
    %606 = vmatprep.mubr.f32.mxu0 0.0
    %607 = vmatmul.mubr.f32.gmra.mrb[0].mxu0 %v247
    %v608 = vpop.f32.mrb[0].mxu0
    %v609 = vadd.f32 0.0, %v608
    %v610 = vpop.f32.mrb[0].mxu0
    %611 = vmatprep.mubr.f32.mxu0 0.0
    %612 = vmatmul.mubr.f32.gmra.mrb[0].mxu0 %v250
    %v613 = vpop.f32.mrb[0].mxu0
    %v614 = vadd.f32 0.0, %v613
    %v615 = vpop.f32.mrb[0].mxu0
    %616 = vmatprep.mubr.f32.mxu0 0.0
    %617 = vmatmul.mubr.f32.gmra.mrb[0].mxu0 %v253
    %v618 = vpop.f32.mrb[0].mxu0
    %v619 = vadd.f32 0.0, %v618
    %v620 = vpop.f32.mrb[0].mxu0
    %621 = vmatprep.mubr.f32.mxu0 0.0
    %622 = vmatmul.mubr.f32.gmra.mrb[0].mxu0 %v256
    %v623 = vpop.f32.mrb[0].mxu0
    %v624 = vadd.f32 0.0, %v623
    %v625 = vpop.f32.mrb[0].mxu0
    %626 = vmatprep.mubr.f32.mxu0 0.0
    %627 = vmatmul.mubr.f32.gmra.mrb[0].mxu0 %v259
    %v628 = vpop.f32.mrb[0].mxu0
    %v629 = vadd.f32 0.0, %v628
    %v630 = vpop.f32.mrb[0].mxu0
    %631 = vmatprep.mubr.f32.mxu0 0.0
    %632 = vmatmul.mubr.f32.gmra.mrb[0].mxu0 %v262
    %v633 = vpop.f32.mrb[0].mxu0
    %v634 = vadd.f32 0.0, %v633
    %v635 = vpop.f32.mrb[0].mxu0
    %636 = vmatprep.mubr.f32.mxu0 0.0
    %637 = vmatmul.mubr.f32.gmra.mrb[0].mxu0 %v265
    %v638 = vpop.f32.mrb[0].mxu0
    %v639 = vadd.f32 0.0, %v638
    %v640 = vpop.f32.mrb[0].mxu0
    %641 = vmatprep.mubr.f32.mxu0 0.0
    %642 = vmatmul.mubr.f32.gmra.mrb[0].mxu0 %v268
    %v643 = vpop.f32.mrb[0].mxu0
    %v644 = vadd.f32 0.0, %v643
    %v645 = vpop.f32.mrb[0].mxu0
    %646 = vmatprep.mubr.f32.mxu0 0.0
    %647 = vmatmul.mubr.f32.gmra.mrb[0].mxu0 %v271
    %v648 = vpop.f32.mrb[0].mxu0
    %v649 = vadd.f32 0.0, %v648
    %v650 = vpop.f32.mrb[0].mxu0
    %651 = vmatprep.mubr.f32.mxu0 0.0
    %652 = vmatmul.mubr.f32.gmra.mrb[0].mxu0 %v274
    %v653 = vpop.f32.mrb[0].mxu0
    %v654 = vadd.f32 0.0, %v653
    %v655 = vpop.f32.mrb[0].mxu0
    %656 = vmatprep.mubr.f32.mxu0 0.0
    %657 = vmatmul.mubr.f32.gmra.mrb[0].mxu0 %v277
    %v658 = vpop.f32.mrb[0].mxu0
    %v659 = vadd.f32 0.0, %v658
    %v660 = vpop.f32.mrb[0].mxu0
    %661 = vmatprep.mubr.f32.mxu0 0.0
    %662 = vmatmul.mubr.f32.gmra.mrb[0].mxu0 %v280
    %v663 = vpop.f32.mrb[0].mxu0
    %v664 = vadd.f32 0.0, %v663
    %v665 = vpop.f32.mrb[0].mxu0
    %666 = vmatprep.mubr.f32.mxu0 0.0
    %667 = vmatmul.mubr.f32.gmra.mrb[0].mxu0 %v283
    %v668 = vpop.f32.mrb[0].mxu0
    %v669 = vadd.f32 0.0, %v668
    %v670 = vpop.f32.mrb[0].mxu0
    %671 = vmatprep.mubr.f32.mxu0 0.0
    %672 = vmatmul.mubr.f32.gmra.mrb[0].mxu0 %v286
    %v673 = vpop.f32.mrb[0].mxu0
    %v674 = vadd.f32 0.0, %v673
    %v675 = vpop.f32.mrb[0].mxu0
    %676 = vdwg.mxu0
    %v677 = vmax.f32 %v359, 0.0
    %v678 = vmax.f32 %v364, 0.0
    %v679 = vmax.f32 %v369, 0.0
    %v680 = vmax.f32 %v374, 0.0
    %v681 = vmax.f32 %v379, 0.0
    %v682 = vmax.f32 %v384, 0.0
    %v683 = vmax.f32 %v389, 0.0
    %v684 = vmax.f32 %v394, 0.0
    %v685 = vmax.f32 %v399, 0.0
    %v686 = vmax.f32 %v404, 0.0
    %v687 = vmax.f32 %v409, 0.0
    %v688 = vmax.f32 %v414, 0.0
    %v689 = vmax.f32 %v419, 0.0
    %v690 = vmax.f32 %v424, 0.0
    %v691 = vmax.f32 %v429, 0.0
    %v692 = vmax.f32 %v434, 0.0
    %v693 = vmax.f32 %v439, 0.0
    %v694 = vmax.f32 %v444, 0.0
    %v695 = vmax.f32 %v449, 0.0
    %v696 = vmax.f32 %v454, 0.0
    %v697 = vmax.f32 %v459, 0.0
    %v698 = vmax.f32 %v464, 0.0
    %v699 = vmax.f32 %v469, 0.0
    %v700 = vmax.f32 %v474, 0.0
    %v701 = vmax.f32 %v479, 0.0
    %v702 = vmax.f32 %v484, 0.0
    %v703 = vmax.f32 %v489, 0.0
    %v704 = vmax.f32 %v494, 0.0
    %v705 = vmax.f32 %v499, 0.0
    %v706 = vmax.f32 %v504, 0.0
    %v707 = vmax.f32 %v509, 0.0
    %v708 = vmax.f32 %v514, 0.0
    %v709 = vmax.f32 %v519, 0.0
    %v710 = vmax.f32 %v524, 0.0
    %v711 = vmax.f32 %v529, 0.0
    %v712 = vmax.f32 %v534, 0.0
    %v713 = vmax.f32 %v539, 0.0
    %v714 = vmax.f32 %v544, 0.0
    %v715 = vmax.f32 %v549, 0.0
    %v716 = vmax.f32 %v554, 0.0
    %v717 = vmax.f32 %v559, 0.0
    %v718 = vmax.f32 %v564, 0.0
    %v719 = vmax.f32 %v569, 0.0
    %v720 = vmax.f32 %v574, 0.0
    %v721 = vmax.f32 %v579, 0.0
    %v722 = vmax.f32 %v584, 0.0
    %v723 = vmax.f32 %v589, 0.0
    %v724 = vmax.f32 %v594, 0.0
    %v725 = vmax.f32 %v599, 0.0
    %v726 = vmax.f32 %v604, 0.0
    %v727 = vmax.f32 %v609, 0.0
    %v728 = vmax.f32 %v614, 0.0
    %v729 = vmax.f32 %v619, 0.0
    %v730 = vmax.f32 %v624, 0.0
    %v731 = vmax.f32 %v629, 0.0
    %v732 = vmax.f32 %v634, 0.0
    %v733 = vmax.f32 %v639, 0.0
    %v734 = vmax.f32 %v644, 0.0
    %v735 = vmax.f32 %v649, 0.0
    %v736 = vmax.f32 %v654, 0.0
    %v737 = vmax.f32 %v659, 0.0
    %v738 = vmax.f32 %v664, 0.0
    %v739 = vmax.f32 %v669, 0.0
    %v740 = vmax.f32 %v674, 0.0
    %v741 = vld [vmem:[%s2] sm:$0xff]
    %v742 = vld [vmem:[%s2 + $0x8] sm:$0xff]
    %v743 = vld [vmem:[%s2 + $0x10] sm:$0xff]
    %v744 = vld [vmem:[%s2 + $0x18] sm:$0xff]
    %vm745 = vcmask 261120
    %v747 = vsel %vm745, %v677, 0
    %v750 = vsel %vm745, %v678, 0
    %v753 = vsel %vm745, %v679, 0
    %v756 = vsel %vm745, %v680, 0
    %v759 = vsel %vm745, %v681, 0
    %v762 = vsel %vm745, %v682, 0
    %v765 = vsel %vm745, %v683, 0
    %v768 = vsel %vm745, %v684, 0
    %v771 = vsel %vm745, %v685, 0
    %v774 = vsel %vm745, %v686, 0
    %v777 = vsel %vm745, %v687, 0
    %v780 = vsel %vm745, %v688, 0
    %v783 = vsel %vm745, %v689, 0
    %v786 = vsel %vm745, %v690, 0
    %v789 = vsel %vm745, %v691, 0
    %v792 = vsel %vm745, %v692, 0
    %v795 = vsel %vm745, %v693, 0
    %v798 = vsel %vm745, %v694, 0
    %v801 = vsel %vm745, %v695, 0
    %v804 = vsel %vm745, %v696, 0
    %v807 = vsel %vm745, %v697, 0
    %v810 = vsel %vm745, %v698, 0
    %v813 = vsel %vm745, %v699, 0
    %v816 = vsel %vm745, %v700, 0
    %v819 = vsel %vm745, %v701, 0
    %v822 = vsel %vm745, %v702, 0
    %v825 = vsel %vm745, %v703, 0
    %v828 = vsel %vm745, %v704, 0
    %v831 = vsel %vm745, %v705, 0
    %v834 = vsel %vm745, %v706, 0
    %v837 = vsel %vm745, %v707, 0
    %v840 = vsel %vm745, %v708, 0
    %v843 = vsel %vm745, %v709, 0
    %v846 = vsel %vm745, %v710, 0
    %v849 = vsel %vm745, %v711, 0
    %v852 = vsel %vm745, %v712, 0
    %v855 = vsel %vm745, %v713, 0
    %v858 = vsel %vm745, %v714, 0
    %v861 = vsel %vm745, %v715, 0
    %v864 = vsel %vm745, %v716, 0
    %v867 = vsel %vm745, %v717, 0
    %v870 = vsel %vm745, %v718, 0
    %v873 = vsel %vm745, %v719, 0
    %v876 = vsel %vm745, %v720, 0
    %v879 = vsel %vm745, %v721, 0
    %v882 = vsel %vm745, %v722, 0
    %v885 = vsel %vm745, %v723, 0
    %v888 = vsel %vm745, %v724, 0
    %v891 = vsel %vm745, %v725, 0
    %v894 = vsel %vm745, %v726, 0
    %v897 = vsel %vm745, %v727, 0
    %v900 = vsel %vm745, %v728, 0
    %v903 = vsel %vm745, %v729, 0
    %v906 = vsel %vm745, %v730, 0
    %v909 = vsel %vm745, %v731, 0
    %v912 = vsel %vm745, %v732, 0
    %v915 = vsel %vm745, %v733, 0
    %v918 = vsel %vm745, %v734, 0
    %v921 = vsel %vm745, %v735, 0
    %v924 = vsel %vm745, %v736, 0
    %v927 = vsel %vm745, %v737, 0
    %v930 = vsel %vm745, %v738, 0
    %v933 = vsel %vm745, %v739, 0
    %v936 = vsel %vm745, %v740, 0
    %938 = vmatprep.subr.mxu0 0.0
    %939 = vmatpush1.msra.mxu0 %v741
    %940 = vmatprep.subr.mxu0 0.0
    %941 = vmatpush1.msra.mxu0 %v742
    %942 = vmatprep.subr.mxu0 0.0
    %943 = vmatpush1.msra.mxu0 %v743
    %944 = vmatprep.subr.mxu0 0.0
    %945 = vmatpush1.msra.mxu0 %v744
    %946 = vmatprep.subr.mxu0 0.0
    %947 = vmatpush1.msra.mxu0 0.0
    %948 = vmatprep.subr.mxu0 0.0
    %949 = vmatpush1.msra.mxu0 0.0
    %950 = vmatprep.subr.mxu0 0.0
    %951 = vmatpush1.msra.mxu0 0.0
    %952 = vmatprep.subr.mxu0 0.0
    %953 = vmatpush1.msra.mxu0 0.0
    %954 = vmatprep.subr.mxu0 0.0
    %955 = vmatpush1.msra.mxu0 0.0
    %956 = vmatprep.subr.mxu0 0.0
    %957 = vmatpush1.msra.mxu0 0.0
    %958 = vmatprep.subr.mxu0 0.0
    %959 = vmatpush1.msra.mxu0 0.0
    %960 = vmatprep.subr.mxu0 0.0
    %961 = vmatpush1.msra.mxu0 0.0
    %962 = vmatprep.subr.mxu0 0.0
    %963 = vmatpush1.msra.mxu0 0.0
    %964 = vmatprep.subr.mxu0 0.0
    %965 = vmatpush1.msra.mxu0 0.0
    %966 = vmatprep.subr.mxu0 0.0
    %967 = vmatpush1.msra.mxu0 0.0
    %968 = vmatprep.subr.mxu0 0.0
    %969 = vmatpush1.msra.mxu0 0.0
    %970 = vmatprep.subr.mxu0 0.0
    %971 = vmatpush1.msra.mxu0 0.0
    %972 = vmatprep.subr.mxu0 0.0
    %973 = vmatpush1.msra.mxu0 0.0
    %974 = vmatprep.subr.mxu0 0.0
    %975 = vmatpush1.msra.mxu0 0.0
    %976 = vmatprep.subr.mxu0 0.0
    %977 = vmatpush1.msra.mxu0 0.0
    %978 = vmatprep.subr.mxu0 0.0
    %979 = vmatpush1.msra.mxu0 0.0
    %980 = vmatprep.subr.mxu0 0.0
    %981 = vmatpush1.msra.mxu0 0.0
    %982 = vmatprep.subr.mxu0 0.0
    %983 = vmatpush1.msra.mxu0 0.0
    %984 = vmatprep.subr.mxu0 0.0
    %985 = vmatpush1.msra.mxu0 0.0
    %986 = vmatprep.subr.mxu0 0.0
    %987 = vmatpush1.msra.mxu0 0.0
    %988 = vmatprep.subr.mxu0 0.0
    %989 = vmatpush1.msra.mxu0 0.0
    %990 = vmatprep.subr.mxu0 0.0
    %991 = vmatpush1.msra.mxu0 0.0
    %992 = vmatprep.subr.mxu0 0.0
    %993 = vmatpush1.msra.mxu0 0.0
    %994 = vmatprep.subr.mxu0 0.0
    %995 = vmatpush1.msra.mxu0 0.0
    %996 = vmatprep.subr.mxu0 0.0
    %997 = vmatpush1.msra.mxu0 0.0
    %998 = vmatprep.subr.mxu0 0.0
    %999 = vmatpush1.msra.mxu0 0.0
    %1000 = vmatprep.subr.mxu0 0.0
    %1001 = vmatpush1.msra.mxu0 0.0
    %1002 = vmatprep.mubr.f32.mxu0 0.0
    %1003 = vmatmul.mubr.f32.gmra.mrb[0].mxu0 %v747
    %v1004 = vpop.f32.mrb[0].mxu0
    %v1005 = vadd.f32 0.0, %v1004
    %v1006 = vpop.f32.mrb[0].mxu0
    %1007 = vmatprep.mubr.f32.mxu0 0.0
    %1008 = vmatmul.mubr.f32.gmra.mrb[0].mxu0 %v750
    %v1009 = vpop.f32.mrb[0].mxu0
    %v1010 = vadd.f32 0.0, %v1009
    %v1011 = vpop.f32.mrb[0].mxu0
    %1012 = vmatprep.mubr.f32.mxu0 0.0
    %1013 = vmatmul.mubr.f32.gmra.mrb[0].mxu0 %v753
    %v1014 = vpop.f32.mrb[0].mxu0
    %v1015 = vadd.f32 0.0, %v1014
    %v1016 = vpop.f32.mrb[0].mxu0
    %1017 = vmatprep.mubr.f32.mxu0 0.0
    %1018 = vmatmul.mubr.f32.gmra.mrb[0].mxu0 %v756
    %v1019 = vpop.f32.mrb[0].mxu0
    %v1020 = vadd.f32 0.0, %v1019
    %v1021 = vpop.f32.mrb[0].mxu0
    %1022 = vmatprep.mubr.f32.mxu0 0.0
    %1023 = vmatmul.mubr.f32.gmra.mrb[0].mxu0 %v759
    %v1024 = vpop.f32.mrb[0].mxu0
    %v1025 = vadd.f32 0.0, %v1024
    %v1026 = vpop.f32.mrb[0].mxu0
    %1027 = vmatprep.mubr.f32.mxu0 0.0
    %1028 = vmatmul.mubr.f32.gmra.mrb[0].mxu0 %v762
    %v1029 = vpop.f32.mrb[0].mxu0
    %v1030 = vadd.f32 0.0, %v1029
    %v1031 = vpop.f32.mrb[0].mxu0
    %1032 = vmatprep.mubr.f32.mxu0 0.0
    %1033 = vmatmul.mubr.f32.gmra.mrb[0].mxu0 %v765
    %v1034 = vpop.f32.mrb[0].mxu0
    %v1035 = vadd.f32 0.0, %v1034
    %v1036 = vpop.f32.mrb[0].mxu0
    %1037 = vmatprep.mubr.f32.mxu0 0.0
    %1038 = vmatmul.mubr.f32.gmra.mrb[0].mxu0 %v768
    %v1039 = vpop.f32.mrb[0].mxu0
    %v1040 = vadd.f32 0.0, %v1039
    %v1041 = vpop.f32.mrb[0].mxu0
    %1042 = vmatprep.mubr.f32.mxu0 0.0
    %1043 = vmatmul.mubr.f32.gmra.mrb[0].mxu0 %v771
    %v1044 = vpop.f32.mrb[0].mxu0
    %v1045 = vadd.f32 0.0, %v1044
    %v1046 = vpop.f32.mrb[0].mxu0
    %1047 = vmatprep.mubr.f32.mxu0 0.0
    %1048 = vmatmul.mubr.f32.gmra.mrb[0].mxu0 %v774
    %v1049 = vpop.f32.mrb[0].mxu0
    %v1050 = vadd.f32 0.0, %v1049
    %v1051 = vpop.f32.mrb[0].mxu0
    %1052 = vmatprep.mubr.f32.mxu0 0.0
    %1053 = vmatmul.mubr.f32.gmra.mrb[0].mxu0 %v777
    %v1054 = vpop.f32.mrb[0].mxu0
    %v1055 = vadd.f32 0.0, %v1054
    %v1056 = vpop.f32.mrb[0].mxu0
    %1057 = vmatprep.mubr.f32.mxu0 0.0
    %1058 = vmatmul.mubr.f32.gmra.mrb[0].mxu0 %v780
    %v1059 = vpop.f32.mrb[0].mxu0
    %v1060 = vadd.f32 0.0, %v1059
    %v1061 = vpop.f32.mrb[0].mxu0
    %1062 = vmatprep.mubr.f32.mxu0 0.0
    %1063 = vmatmul.mubr.f32.gmra.mrb[0].mxu0 %v783
    %v1064 = vpop.f32.mrb[0].mxu0
    %v1065 = vadd.f32 0.0, %v1064
    %v1066 = vpop.f32.mrb[0].mxu0
    %1067 = vmatprep.mubr.f32.mxu0 0.0
    %1068 = vmatmul.mubr.f32.gmra.mrb[0].mxu0 %v786
    %v1069 = vpop.f32.mrb[0].mxu0
    %v1070 = vadd.f32 0.0, %v1069
    %v1071 = vpop.f32.mrb[0].mxu0
    %1072 = vmatprep.mubr.f32.mxu0 0.0
    %1073 = vmatmul.mubr.f32.gmra.mrb[0].mxu0 %v789
    %v1074 = vpop.f32.mrb[0].mxu0
    %v1075 = vadd.f32 0.0, %v1074
    %v1076 = vpop.f32.mrb[0].mxu0
    %1077 = vmatprep.mubr.f32.mxu0 0.0
    %1078 = vmatmul.mubr.f32.gmra.mrb[0].mxu0 %v792
    %v1079 = vpop.f32.mrb[0].mxu0
    %v1080 = vadd.f32 0.0, %v1079
    %v1081 = vpop.f32.mrb[0].mxu0
    %1082 = vmatprep.mubr.f32.mxu0 0.0
    %1083 = vmatmul.mubr.f32.gmra.mrb[0].mxu0 %v795
    %v1084 = vpop.f32.mrb[0].mxu0
    %v1085 = vadd.f32 0.0, %v1084
    %v1086 = vpop.f32.mrb[0].mxu0
    %1087 = vmatprep.mubr.f32.mxu0 0.0
    %1088 = vmatmul.mubr.f32.gmra.mrb[0].mxu0 %v798
    %v1089 = vpop.f32.mrb[0].mxu0
    %v1090 = vadd.f32 0.0, %v1089
    %v1091 = vpop.f32.mrb[0].mxu0
    %1092 = vmatprep.mubr.f32.mxu0 0.0
    %1093 = vmatmul.mubr.f32.gmra.mrb[0].mxu0 %v801
    %v1094 = vpop.f32.mrb[0].mxu0
    %v1095 = vadd.f32 0.0, %v1094
    %v1096 = vpop.f32.mrb[0].mxu0
    %1097 = vmatprep.mubr.f32.mxu0 0.0
    %1098 = vmatmul.mubr.f32.gmra.mrb[0].mxu0 %v804
    %v1099 = vpop.f32.mrb[0].mxu0
    %v1100 = vadd.f32 0.0, %v1099
    %v1101 = vpop.f32.mrb[0].mxu0
    %1102 = vmatprep.mubr.f32.mxu0 0.0
    %1103 = vmatmul.mubr.f32.gmra.mrb[0].mxu0 %v807
    %v1104 = vpop.f32.mrb[0].mxu0
    %v1105 = vadd.f32 0.0, %v1104
    %v1106 = vpop.f32.mrb[0].mxu0
    %1107 = vmatprep.mubr.f32.mxu0 0.0
    %1108 = vmatmul.mubr.f32.gmra.mrb[0].mxu0 %v810
    %v1109 = vpop.f32.mrb[0].mxu0
    %v1110 = vadd.f32 0.0, %v1109
    %v1111 = vpop.f32.mrb[0].mxu0
    %1112 = vmatprep.mubr.f32.mxu0 0.0
    %1113 = vmatmul.mubr.f32.gmra.mrb[0].mxu0 %v813
    %v1114 = vpop.f32.mrb[0].mxu0
    %v1115 = vadd.f32 0.0, %v1114
    %v1116 = vpop.f32.mrb[0].mxu0
    %1117 = vmatprep.mubr.f32.mxu0 0.0
    %1118 = vmatmul.mubr.f32.gmra.mrb[0].mxu0 %v816
    %v1119 = vpop.f32.mrb[0].mxu0
    %v1120 = vadd.f32 0.0, %v1119
    %v1121 = vpop.f32.mrb[0].mxu0
    %1122 = vmatprep.mubr.f32.mxu0 0.0
    %1123 = vmatmul.mubr.f32.gmra.mrb[0].mxu0 %v819
    %v1124 = vpop.f32.mrb[0].mxu0
    %v1125 = vadd.f32 0.0, %v1124
    %v1126 = vpop.f32.mrb[0].mxu0
    %1127 = vmatprep.mubr.f32.mxu0 0.0
    %1128 = vmatmul.mubr.f32.gmra.mrb[0].mxu0 %v822
    %v1129 = vpop.f32.mrb[0].mxu0
    %v1130 = vadd.f32 0.0, %v1129
    %v1131 = vpop.f32.mrb[0].mxu0
    %1132 = vmatprep.mubr.f32.mxu0 0.0
    %1133 = vmatmul.mubr.f32.gmra.mrb[0].mxu0 %v825
    %v1134 = vpop.f32.mrb[0].mxu0
    %v1135 = vadd.f32 0.0, %v1134
    %v1136 = vpop.f32.mrb[0].mxu0
    %1137 = vmatprep.mubr.f32.mxu0 0.0
    %1138 = vmatmul.mubr.f32.gmra.mrb[0].mxu0 %v828
    %v1139 = vpop.f32.mrb[0].mxu0
    %v1140 = vadd.f32 0.0, %v1139
    %v1141 = vpop.f32.mrb[0].mxu0
    %1142 = vmatprep.mubr.f32.mxu0 0.0
    %1143 = vmatmul.mubr.f32.gmra.mrb[0].mxu0 %v831
    %v1144 = vpop.f32.mrb[0].mxu0
    %v1145 = vadd.f32 0.0, %v1144
    %v1146 = vpop.f32.mrb[0].mxu0
    %1147 = vmatprep.mubr.f32.mxu0 0.0
    %1148 = vmatmul.mubr.f32.gmra.mrb[0].mxu0 %v834
    %v1149 = vpop.f32.mrb[0].mxu0
    %v1150 = vadd.f32 0.0, %v1149
    %v1151 = vpop.f32.mrb[0].mxu0
    %1152 = vmatprep.mubr.f32.mxu0 0.0
    %1153 = vmatmul.mubr.f32.gmra.mrb[0].mxu0 %v837
    %v1154 = vpop.f32.mrb[0].mxu0
    %v1155 = vadd.f32 0.0, %v1154
    %v1156 = vpop.f32.mrb[0].mxu0
    %1157 = vmatprep.mubr.f32.mxu0 0.0
    %1158 = vmatmul.mubr.f32.gmra.mrb[0].mxu0 %v840
    %v1159 = vpop.f32.mrb[0].mxu0
    %v1160 = vadd.f32 0.0, %v1159
    %v1161 = vpop.f32.mrb[0].mxu0
    %1162 = vmatprep.mubr.f32.mxu0 0.0
    %1163 = vmatmul.mubr.f32.gmra.mrb[0].mxu0 %v843
    %v1164 = vpop.f32.mrb[0].mxu0
    %v1165 = vadd.f32 0.0, %v1164
    %v1166 = vpop.f32.mrb[0].mxu0
    %1167 = vmatprep.mubr.f32.mxu0 0.0
    %1168 = vmatmul.mubr.f32.gmra.mrb[0].mxu0 %v846
    %v1169 = vpop.f32.mrb[0].mxu0
    %v1170 = vadd.f32 0.0, %v1169
    %v1171 = vpop.f32.mrb[0].mxu0
    %1172 = vmatprep.mubr.f32.mxu0 0.0
    %1173 = vmatmul.mubr.f32.gmra.mrb[0].mxu0 %v849
    %v1174 = vpop.f32.mrb[0].mxu0
    %v1175 = vadd.f32 0.0, %v1174
    %v1176 = vpop.f32.mrb[0].mxu0
    %1177 = vmatprep.mubr.f32.mxu0 0.0
    %1178 = vmatmul.mubr.f32.gmra.mrb[0].mxu0 %v852
    %v1179 = vpop.f32.mrb[0].mxu0
    %v1180 = vadd.f32 0.0, %v1179
    %v1181 = vpop.f32.mrb[0].mxu0
    %1182 = vmatprep.mubr.f32.mxu0 0.0
    %1183 = vmatmul.mubr.f32.gmra.mrb[0].mxu0 %v855
    %v1184 = vpop.f32.mrb[0].mxu0
    %v1185 = vadd.f32 0.0, %v1184
    %v1186 = vpop.f32.mrb[0].mxu0
    %1187 = vmatprep.mubr.f32.mxu0 0.0
    %1188 = vmatmul.mubr.f32.gmra.mrb[0].mxu0 %v858
    %v1189 = vpop.f32.mrb[0].mxu0
    %v1190 = vadd.f32 0.0, %v1189
    %v1191 = vpop.f32.mrb[0].mxu0
    %1192 = vmatprep.mubr.f32.mxu0 0.0
    %1193 = vmatmul.mubr.f32.gmra.mrb[0].mxu0 %v861
    %v1194 = vpop.f32.mrb[0].mxu0
    %v1195 = vadd.f32 0.0, %v1194
    %v1196 = vpop.f32.mrb[0].mxu0
    %1197 = vmatprep.mubr.f32.mxu0 0.0
    %1198 = vmatmul.mubr.f32.gmra.mrb[0].mxu0 %v864
    %v1199 = vpop.f32.mrb[0].mxu0
    %v1200 = vadd.f32 0.0, %v1199
    %v1201 = vpop.f32.mrb[0].mxu0
    %1202 = vmatprep.mubr.f32.mxu0 0.0
    %1203 = vmatmul.mubr.f32.gmra.mrb[0].mxu0 %v867
    %v1204 = vpop.f32.mrb[0].mxu0
    %v1205 = vadd.f32 0.0, %v1204
    %v1206 = vpop.f32.mrb[0].mxu0
    %1207 = vmatprep.mubr.f32.mxu0 0.0
    %1208 = vmatmul.mubr.f32.gmra.mrb[0].mxu0 %v870
    %v1209 = vpop.f32.mrb[0].mxu0
    %v1210 = vadd.f32 0.0, %v1209
    %v1211 = vpop.f32.mrb[0].mxu0
    %1212 = vmatprep.mubr.f32.mxu0 0.0
    %1213 = vmatmul.mubr.f32.gmra.mrb[0].mxu0 %v873
    %v1214 = vpop.f32.mrb[0].mxu0
    %v1215 = vadd.f32 0.0, %v1214
    %v1216 = vpop.f32.mrb[0].mxu0
    %1217 = vmatprep.mubr.f32.mxu0 0.0
    %1218 = vmatmul.mubr.f32.gmra.mrb[0].mxu0 %v876
    %v1219 = vpop.f32.mrb[0].mxu0
    %v1220 = vadd.f32 0.0, %v1219
    %v1221 = vpop.f32.mrb[0].mxu0
    %1222 = vmatprep.mubr.f32.mxu0 0.0
    %1223 = vmatmul.mubr.f32.gmra.mrb[0].mxu0 %v879
    %v1224 = vpop.f32.mrb[0].mxu0
    %v1225 = vadd.f32 0.0, %v1224
    %v1226 = vpop.f32.mrb[0].mxu0
    %1227 = vmatprep.mubr.f32.mxu0 0.0
    %1228 = vmatmul.mubr.f32.gmra.mrb[0].mxu0 %v882
    %v1229 = vpop.f32.mrb[0].mxu0
    %v1230 = vadd.f32 0.0, %v1229
    %v1231 = vpop.f32.mrb[0].mxu0
    %1232 = vmatprep.mubr.f32.mxu0 0.0
    %1233 = vmatmul.mubr.f32.gmra.mrb[0].mxu0 %v885
    %v1234 = vpop.f32.mrb[0].mxu0
    %v1235 = vadd.f32 0.0, %v1234
    %v1236 = vpop.f32.mrb[0].mxu0
    %1237 = vmatprep.mubr.f32.mxu0 0.0
    %1238 = vmatmul.mubr.f32.gmra.mrb[0].mxu0 %v888
    %v1239 = vpop.f32.mrb[0].mxu0
    %v1240 = vadd.f32 0.0, %v1239
    %v1241 = vpop.f32.mrb[0].mxu0
    %1242 = vmatprep.mubr.f32.mxu0 0.0
    %1243 = vmatmul.mubr.f32.gmra.mrb[0].mxu0 %v891
    %v1244 = vpop.f32.mrb[0].mxu0
    %v1245 = vadd.f32 0.0, %v1244
    %v1246 = vpop.f32.mrb[0].mxu0
    %1247 = vmatprep.mubr.f32.mxu0 0.0
    %1248 = vmatmul.mubr.f32.gmra.mrb[0].mxu0 %v894
    %v1249 = vpop.f32.mrb[0].mxu0
    %v1250 = vadd.f32 0.0, %v1249
    %v1251 = vpop.f32.mrb[0].mxu0
    %1252 = vmatprep.mubr.f32.mxu0 0.0
    %1253 = vmatmul.mubr.f32.gmra.mrb[0].mxu0 %v897
    %v1254 = vpop.f32.mrb[0].mxu0
    %v1255 = vadd.f32 0.0, %v1254
    %v1256 = vpop.f32.mrb[0].mxu0
    %1257 = vmatprep.mubr.f32.mxu0 0.0
    %1258 = vmatmul.mubr.f32.gmra.mrb[0].mxu0 %v900
    %v1259 = vpop.f32.mrb[0].mxu0
    %v1260 = vadd.f32 0.0, %v1259
    %v1261 = vpop.f32.mrb[0].mxu0
    %1262 = vmatprep.mubr.f32.mxu0 0.0
    %1263 = vmatmul.mubr.f32.gmra.mrb[0].mxu0 %v903
    %v1264 = vpop.f32.mrb[0].mxu0
    %v1265 = vadd.f32 0.0, %v1264
    %v1266 = vpop.f32.mrb[0].mxu0
    %1267 = vmatprep.mubr.f32.mxu0 0.0
    %1268 = vmatmul.mubr.f32.gmra.mrb[0].mxu0 %v906
    %v1269 = vpop.f32.mrb[0].mxu0
    %v1270 = vadd.f32 0.0, %v1269
    %v1271 = vpop.f32.mrb[0].mxu0
    %1272 = vmatprep.mubr.f32.mxu0 0.0
    %1273 = vmatmul.mubr.f32.gmra.mrb[0].mxu0 %v909
    %v1274 = vpop.f32.mrb[0].mxu0
    %v1275 = vadd.f32 0.0, %v1274
    %v1276 = vpop.f32.mrb[0].mxu0
    %1277 = vmatprep.mubr.f32.mxu0 0.0
    %1278 = vmatmul.mubr.f32.gmra.mrb[0].mxu0 %v912
    %v1279 = vpop.f32.mrb[0].mxu0
    %v1280 = vadd.f32 0.0, %v1279
    %v1281 = vpop.f32.mrb[0].mxu0
    %1282 = vmatprep.mubr.f32.mxu0 0.0
    %1283 = vmatmul.mubr.f32.gmra.mrb[0].mxu0 %v915
    %v1284 = vpop.f32.mrb[0].mxu0
    %v1285 = vadd.f32 0.0, %v1284
    %v1286 = vpop.f32.mrb[0].mxu0
    %1287 = vmatprep.mubr.f32.mxu0 0.0
    %1288 = vmatmul.mubr.f32.gmra.mrb[0].mxu0 %v918
    %v1289 = vpop.f32.mrb[0].mxu0
    %v1290 = vadd.f32 0.0, %v1289
    %v1291 = vpop.f32.mrb[0].mxu0
    %1292 = vmatprep.mubr.f32.mxu0 0.0
    %1293 = vmatmul.mubr.f32.gmra.mrb[0].mxu0 %v921
    %v1294 = vpop.f32.mrb[0].mxu0
    %v1295 = vadd.f32 0.0, %v1294
    %v1296 = vpop.f32.mrb[0].mxu0
    %1297 = vmatprep.mubr.f32.mxu0 0.0
    %1298 = vmatmul.mubr.f32.gmra.mrb[0].mxu0 %v924
    %v1299 = vpop.f32.mrb[0].mxu0
    %v1300 = vadd.f32 0.0, %v1299
    %v1301 = vpop.f32.mrb[0].mxu0
    %1302 = vmatprep.mubr.f32.mxu0 0.0
    %1303 = vmatmul.mubr.f32.gmra.mrb[0].mxu0 %v927
    %v1304 = vpop.f32.mrb[0].mxu0
    %v1305 = vadd.f32 0.0, %v1304
    %v1306 = vpop.f32.mrb[0].mxu0
    %1307 = vmatprep.mubr.f32.mxu0 0.0
    %1308 = vmatmul.mubr.f32.gmra.mrb[0].mxu0 %v930
    %v1309 = vpop.f32.mrb[0].mxu0
    %v1310 = vadd.f32 0.0, %v1309
    %v1311 = vpop.f32.mrb[0].mxu0
    %1312 = vmatprep.mubr.f32.mxu0 0.0
    %1313 = vmatmul.mubr.f32.gmra.mrb[0].mxu0 %v933
    %v1314 = vpop.f32.mrb[0].mxu0
    %v1315 = vadd.f32 0.0, %v1314
    %v1316 = vpop.f32.mrb[0].mxu0
    %1317 = vmatprep.mubr.f32.mxu0 0.0
    %1318 = vmatmul.mubr.f32.gmra.mrb[0].mxu0 %v936
    %v1319 = vpop.f32.mrb[0].mxu0
    %v1320 = vadd.f32 0.0, %v1319
    %v1321 = vpop.f32.mrb[0].mxu0
    %1322 = vdwg.mxu0
    %v1323 = vld [vmem:[%s3] sm:$0xff]
    %v1325 = vsel %vm745, %v1323, 0
    %v1328 = vsel %vm745, %v1005, 0
    %v1331 = vsel %vm745, %v1010, 0
    %v1334 = vsel %vm745, %v1015, 0
    %v1337 = vsel %vm745, %v1020, 0
    %v1340 = vsel %vm745, %v1025, 0
    %v1343 = vsel %vm745, %v1030, 0
    %v1346 = vsel %vm745, %v1035, 0
    %v1349 = vsel %vm745, %v1040, 0
    %v1352 = vsel %vm745, %v1045, 0
    %v1355 = vsel %vm745, %v1050, 0
    %v1358 = vsel %vm745, %v1055, 0
    %v1361 = vsel %vm745, %v1060, 0
    %v1364 = vsel %vm745, %v1065, 0
    %v1367 = vsel %vm745, %v1070, 0
    %v1370 = vsel %vm745, %v1075, 0
    %v1373 = vsel %vm745, %v1080, 0
    %v1376 = vsel %vm745, %v1085, 0
    %v1379 = vsel %vm745, %v1090, 0
    %v1382 = vsel %vm745, %v1095, 0
    %v1385 = vsel %vm745, %v1100, 0
    %v1388 = vsel %vm745, %v1105, 0
    %v1391 = vsel %vm745, %v1110, 0
    %v1394 = vsel %vm745, %v1115, 0
    %v1397 = vsel %vm745, %v1120, 0
    %v1400 = vsel %vm745, %v1125, 0
    %v1403 = vsel %vm745, %v1130, 0
    %v1406 = vsel %vm745, %v1135, 0
    %v1409 = vsel %vm745, %v1140, 0
    %v1412 = vsel %vm745, %v1145, 0
    %v1415 = vsel %vm745, %v1150, 0
    %v1418 = vsel %vm745, %v1155, 0
    %v1421 = vsel %vm745, %v1160, 0
    %1423 = vmatprep.subr.mxu0 0.0
    %1424 = vmatpush1.xpose.msra.mxu0 %v1328
    %1425 = vmatprep.subr.mxu0 0.0
    %1426 = vmatpush1.xpose.msra.mxu0 %v1331
    %1427 = vmatprep.subr.mxu0 0.0
    %1428 = vmatpush1.xpose.msra.mxu0 %v1334
    %1429 = vmatprep.subr.mxu0 0.0
    %1430 = vmatpush1.xpose.msra.mxu0 %v1337
    %1431 = vmatprep.subr.mxu0 0.0
    %1432 = vmatpush1.xpose.msra.mxu0 %v1340
    %1433 = vmatprep.subr.mxu0 0.0
    %1434 = vmatpush1.xpose.msra.mxu0 %v1343
    %1435 = vmatprep.subr.mxu0 0.0
    %1436 = vmatpush1.xpose.msra.mxu0 %v1346
    %1437 = vmatprep.subr.mxu0 0.0
    %1438 = vmatpush1.xpose.msra.mxu0 %v1349
    %1439 = vmatprep.subr.mxu0 0.0
    %1440 = vmatpush1.xpose.msra.mxu0 %v1352
    %1441 = vmatprep.subr.mxu0 0.0
    %1442 = vmatpush1.xpose.msra.mxu0 %v1355
    %1443 = vmatprep.subr.mxu0 0.0
    %1444 = vmatpush1.xpose.msra.mxu0 %v1358
    %1445 = vmatprep.subr.mxu0 0.0
    %1446 = vmatpush1.xpose.msra.mxu0 %v1361
    %1447 = vmatprep.subr.mxu0 0.0
    %1448 = vmatpush1.xpose.msra.mxu0 %v1364
    %1449 = vmatprep.subr.mxu0 0.0
    %1450 = vmatpush1.xpose.msra.mxu0 %v1367
    %1451 = vmatprep.subr.mxu0 0.0
    %1452 = vmatpush1.xpose.msra.mxu0 %v1370
    %1453 = vmatprep.subr.mxu0 0.0
    %1454 = vmatpush1.xpose.msra.mxu0 %v1373
    %1455 = vmatprep.subr.mxu0 0.0
    %1456 = vmatpush1.xpose.msra.mxu0 %v1376
    %1457 = vmatprep.subr.mxu0 0.0
    %1458 = vmatpush1.xpose.msra.mxu0 %v1379
    %1459 = vmatprep.subr.mxu0 0.0
    %1460 = vmatpush1.xpose.msra.mxu0 %v1382
    %1461 = vmatprep.subr.mxu0 0.0
    %1462 = vmatpush1.xpose.msra.mxu0 %v1385
    %1463 = vmatprep.subr.mxu0 0.0
    %1464 = vmatpush1.xpose.msra.mxu0 %v1388
    %1465 = vmatprep.subr.mxu0 0.0
    %1466 = vmatpush1.xpose.msra.mxu0 %v1391
    %1467 = vmatprep.subr.mxu0 0.0
    %1468 = vmatpush1.xpose.msra.mxu0 %v1394
    %1469 = vmatprep.subr.mxu0 0.0
    %1470 = vmatpush1.xpose.msra.mxu0 %v1397
    %1471 = vmatprep.subr.mxu0 0.0
    %1472 = vmatpush1.xpose.msra.mxu0 %v1400
    %1473 = vmatprep.subr.mxu0 0.0
    %1474 = vmatpush1.xpose.msra.mxu0 %v1403
    %1475 = vmatprep.subr.mxu0 0.0
    %1476 = vmatpush1.xpose.msra.mxu0 %v1406
    %1477 = vmatprep.subr.mxu0 0.0
    %1478 = vmatpush1.xpose.msra.mxu0 %v1409
    %1479 = vmatprep.subr.mxu0 0.0
    %1480 = vmatpush1.xpose.msra.mxu0 %v1412
    %1481 = vmatprep.subr.mxu0 0.0
    %1482 = vmatpush1.xpose.msra.mxu0 %v1415
    %1483 = vmatprep.subr.mxu0 0.0
    %1484 = vmatpush1.xpose.msra.mxu0 %v1418
    %1485 = vmatprep.subr.mxu0 0.0
    %1486 = vmatpush1.xpose.msra.mxu0 %v1421
    %1487 = vmatprep.mubr.f32.mxu0 0.0
    %1488 = vmatmul.mubr.f32.gmra.mrb[0].mxu0 %v1325
    %v1489 = vpop.f32.mrb[0].mxu0
    %v1490 = vadd.f32 0.0, %v1489
    %v1491 = vpop.f32.mrb[0].mxu0
    %v1492 = vadd.f32 0.0, %v1491
    %1493 = vdwg.mxu0
    %v1494 = vmul.f32 %v1490, 0.17677669
    %v1495 = vmul.f32 %v1492, 0.17677669
    %v1496 = vmax.f32 %v1494, %v1495
    %1497 = vmax.xlane.f32.xlu0 %v1496
    %v1498 = vpop.xlane.xlu0 %1497
    %v1499 = vsub.f32 %v1494, %v1498
    %v1500 = vsub.f32 %v1495, %v1498
    %v1501 = vmul.f32 %v1499, 1.442695
    %v1502 = vpow.pop %v1501
    %v1503 = vmul.f32 %v1500, 1.442695
    %v1504 = vpow.pop %v1503
    %v1505 = vadd.f32 %v1502, %v1504
    %1506 = vadd.xlane.f32.xlu0 %v1505
    %v1507 = vpop.xlane.xlu0 %1506
    %v1508 = vrcp.pop %v1507
    %v1509 = vmul.f32 %v1502, %v1508
    %v1510 = vmul.f32 %v1504, %v1508
    %1511 = vmatprep.subr.mxu0 0.0
    %1512 = vmatpush1.msra.mxu0 %v1005
    %1513 = vmatprep.subr.mxu0 0.0
    %1514 = vmatpush1.msra.mxu0 %v1010
    %1515 = vmatprep.subr.mxu0 0.0
    %1516 = vmatpush1.msra.mxu0 %v1015
    %1517 = vmatprep.subr.mxu0 0.0
    %1518 = vmatpush1.msra.mxu0 %v1020
    %1519 = vmatprep.subr.mxu0 0.0
    %1520 = vmatpush1.msra.mxu0 %v1025
    %1521 = vmatprep.subr.mxu0 0.0
    %1522 = vmatpush1.msra.mxu0 %v1030
    %1523 = vmatprep.subr.mxu0 0.0
    %1524 = vmatpush1.msra.mxu0 %v1035
    %1525 = vmatprep.subr.mxu0 0.0
    %1526 = vmatpush1.msra.mxu0 %v1040
    %1527 = vmatprep.subr.mxu0 0.0
    %1528 = vmatpush1.msra.mxu0 %v1045
    %1529 = vmatprep.subr.mxu0 0.0
    %1530 = vmatpush1.msra.mxu0 %v1050
    %1531 = vmatprep.subr.mxu0 0.0
    %1532 = vmatpush1.msra.mxu0 %v1055
    %1533 = vmatprep.subr.mxu0 0.0
    %1534 = vmatpush1.msra.mxu0 %v1060
    %1535 = vmatprep.subr.mxu0 0.0
    %1536 = vmatpush1.msra.mxu0 %v1065
    %1537 = vmatprep.subr.mxu0 0.0
    %1538 = vmatpush1.msra.mxu0 %v1070
    %1539 = vmatprep.subr.mxu0 0.0
    %1540 = vmatpush1.msra.mxu0 %v1075
    %1541 = vmatprep.subr.mxu0 0.0
    %1542 = vmatpush1.msra.mxu0 %v1080
    %1543 = vmatprep.subr.mxu0 0.0
    %1544 = vmatpush1.msra.mxu0 %v1085
    %1545 = vmatprep.subr.mxu0 0.0
    %1546 = vmatpush1.msra.mxu0 %v1090
    %1547 = vmatprep.subr.mxu0 0.0
    %1548 = vmatpush1.msra.mxu0 %v1095
    %1549 = vmatprep.subr.mxu0 0.0
    %1550 = vmatpush1.msra.mxu0 %v1100
    %1551 = vmatprep.subr.mxu0 0.0
    %1552 = vmatpush1.msra.mxu0 %v1105
    %1553 = vmatprep.subr.mxu0 0.0
    %1554 = vmatpush1.msra.mxu0 %v1110
    %1555 = vmatprep.subr.mxu0 0.0
    %1556 = vmatpush1.msra.mxu0 %v1115
    %1557 = vmatprep.subr.mxu0 0.0
    %1558 = vmatpush1.msra.mxu0 %v1120
    %1559 = vmatprep.subr.mxu0 0.0
    %1560 = vmatpush1.msra.mxu0 %v1125
    %1561 = vmatprep.subr.mxu0 0.0
    %1562 = vmatpush1.msra.mxu0 %v1130
    %1563 = vmatprep.subr.mxu0 0.0
    %1564 = vmatpush1.msra.mxu0 %v1135
    %1565 = vmatprep.subr.mxu0 0.0
    %1566 = vmatpush1.msra.mxu0 %v1140
    %1567 = vmatprep.subr.mxu0 0.0
    %1568 = vmatpush1.msra.mxu0 %v1145
    %1569 = vmatprep.subr.mxu0 0.0
    %1570 = vmatpush1.msra.mxu0 %v1150
    %1571 = vmatprep.subr.mxu0 0.0
    %1572 = vmatpush1.msra.mxu0 %v1155
    %1573 = vmatprep.subr.mxu0 0.0
    %1574 = vmatpush1.msra.mxu0 %v1160
    %1575 = vmatprep.mubr.f32.mxu0 %v1510
    %1576 = vmatmul.mubr.f32.gmra.mrb[0].mxu0 %v1509
    %v1577 = vpop.f32.mrb[0].mxu0
    %v1578 = vadd.f32 0.0, %v1577
    %v1579 = vpop.f32.mrb[0].mxu0
    %1580 = vdwg.mxu0
    %v1581 = vld [vmem:[%s4] sm:$0xff]
    %v1582 = vld [vmem:[%s4 + $0x8] sm:$0xff]
    %v1583 = vld [vmem:[%s4 + $0x10] sm:$0xff]
    %v1584 = vld [vmem:[%s4 + $0x18] sm:$0xff]
    %v1586 = vsel %vm745, %v1578, 0
    %1588 = vmatprep.subr.mxu0 0.0
    %1589 = vmatpush1.msra.mxu0 %v1581
    %1590 = vmatprep.subr.mxu0 0.0
    %1591 = vmatpush1.msra.mxu0 %v1582
    %1592 = vmatprep.subr.mxu0 0.0
    %1593 = vmatpush1.msra.mxu0 %v1583
    %1594 = vmatprep.subr.mxu0 0.0
    %1595 = vmatpush1.msra.mxu0 %v1584
    %1596 = vmatprep.subr.mxu0 0.0
    %1597 = vmatpush1.msra.mxu0 0.0
    %1598 = vmatprep.subr.mxu0 0.0
    %1599 = vmatpush1.msra.mxu0 0.0
    %1600 = vmatprep.subr.mxu0 0.0
    %1601 = vmatpush1.msra.mxu0 0.0
    %1602 = vmatprep.subr.mxu0 0.0
    %1603 = vmatpush1.msra.mxu0 0.0
    %1604 = vmatprep.subr.mxu0 0.0
    %1605 = vmatpush1.msra.mxu0 0.0
    %1606 = vmatprep.subr.mxu0 0.0
    %1607 = vmatpush1.msra.mxu0 0.0
    %1608 = vmatprep.subr.mxu0 0.0
    %1609 = vmatpush1.msra.mxu0 0.0
    %1610 = vmatprep.subr.mxu0 0.0
    %1611 = vmatpush1.msra.mxu0 0.0
    %1612 = vmatprep.subr.mxu0 0.0
    %1613 = vmatpush1.msra.mxu0 0.0
    %1614 = vmatprep.subr.mxu0 0.0
    %1615 = vmatpush1.msra.mxu0 0.0
    %1616 = vmatprep.subr.mxu0 0.0
    %1617 = vmatpush1.msra.mxu0 0.0
    %1618 = vmatprep.subr.mxu0 0.0
    %1619 = vmatpush1.msra.mxu0 0.0
    %1620 = vmatprep.subr.mxu0 0.0
    %1621 = vmatpush1.msra.mxu0 0.0
    %1622 = vmatprep.subr.mxu0 0.0
    %1623 = vmatpush1.msra.mxu0 0.0
    %1624 = vmatprep.subr.mxu0 0.0
    %1625 = vmatpush1.msra.mxu0 0.0
    %1626 = vmatprep.subr.mxu0 0.0
    %1627 = vmatpush1.msra.mxu0 0.0
    %1628 = vmatprep.subr.mxu0 0.0
    %1629 = vmatpush1.msra.mxu0 0.0
    %1630 = vmatprep.subr.mxu0 0.0
    %1631 = vmatpush1.msra.mxu0 0.0
    %1632 = vmatprep.subr.mxu0 0.0
    %1633 = vmatpush1.msra.mxu0 0.0
    %1634 = vmatprep.subr.mxu0 0.0
    %1635 = vmatpush1.msra.mxu0 0.0
    %1636 = vmatprep.subr.mxu0 0.0
    %1637 = vmatpush1.msra.mxu0 0.0
    %1638 = vmatprep.subr.mxu0 0.0
    %1639 = vmatpush1.msra.mxu0 0.0
    %1640 = vmatprep.subr.mxu0 0.0
    %1641 = vmatpush1.msra.mxu0 0.0
    %1642 = vmatprep.subr.mxu0 0.0
    %1643 = vmatpush1.msra.mxu0 0.0
    %1644 = vmatprep.subr.mxu0 0.0
    %1645 = vmatpush1.msra.mxu0 0.0
    %1646 = vmatprep.subr.mxu0 0.0
    %1647 = vmatpush1.msra.mxu0 0.0
    %1648 = vmatprep.subr.mxu0 0.0
    %1649 = vmatpush1.msra.mxu0 0.0
    %1650 = vmatprep.subr.mxu0 0.0
    %1651 = vmatpush1.msra.mxu0 0.0
    %1652 = vmatprep.mubr.f32.mxu0 0.0
    %1653 = vmatmul.mubr.f32.gmra.mrb[0].mxu0 %v1586
    %v1654 = vpop.f32.mrb[0].mxu0
    %v1655 = vadd.f32 0.0, %v1654
    %v1656 = vpop.f32.mrb[0].mxu0
    %1657 = vdwg.mxu0
    %v1658 = vmax.f32 %v1655, 0.0
    %v1660 = vsel %vm745, %v1165, 0
    %v1663 = vsel %vm745, %v1170, 0
    %v1666 = vsel %vm745, %v1175, 0
    %v1669 = vsel %vm745, %v1180, 0
    %v1672 = vsel %vm745, %v1185, 0
    %v1675 = vsel %vm745, %v1190, 0
    %v1678 = vsel %vm745, %v1195, 0
    %v1681 = vsel %vm745, %v1200, 0
    %v1684 = vsel %vm745, %v1205, 0
    %v1687 = vsel %vm745, %v1210, 0
    %v1690 = vsel %vm745, %v1215, 0
    %v1693 = vsel %vm745, %v1220, 0
    %v1696 = vsel %vm745, %v1225, 0
    %v1699 = vsel %vm745, %v1230, 0
    %v1702 = vsel %vm745, %v1235, 0
    %v1705 = vsel %vm745, %v1240, 0
    %v1708 = vsel %vm745, %v1245, 0
    %v1711 = vsel %vm745, %v1250, 0
    %v1714 = vsel %vm745, %v1255, 0
    %v1717 = vsel %vm745, %v1260, 0
    %v1720 = vsel %vm745, %v1265, 0
    %v1723 = vsel %vm745, %v1270, 0
    %v1726 = vsel %vm745, %v1275, 0
    %v1729 = vsel %vm745, %v1280, 0
    %v1732 = vsel %vm745, %v1285, 0
    %v1735 = vsel %vm745, %v1290, 0
    %v1738 = vsel %vm745, %v1295, 0
    %v1741 = vsel %vm745, %v1300, 0
    %v1744 = vsel %vm745, %v1305, 0
    %v1747 = vsel %vm745, %v1310, 0
    %v1750 = vsel %vm745, %v1315, 0
    %v1753 = vsel %vm745, %v1320, 0
    %1755 = vmatprep.subr.mxu0 0.0
    %1756 = vmatpush1.xpose.msra.mxu0 %v1660
    %1757 = vmatprep.subr.mxu0 0.0
    %1758 = vmatpush1.xpose.msra.mxu0 %v1663
    %1759 = vmatprep.subr.mxu0 0.0
    %1760 = vmatpush1.xpose.msra.mxu0 %v1666
    %1761 = vmatprep.subr.mxu0 0.0
    %1762 = vmatpush1.xpose.msra.mxu0 %v1669
    %1763 = vmatprep.subr.mxu0 0.0
    %1764 = vmatpush1.xpose.msra.mxu0 %v1672
    %1765 = vmatprep.subr.mxu0 0.0
    %1766 = vmatpush1.xpose.msra.mxu0 %v1675
    %1767 = vmatprep.subr.mxu0 0.0
    %1768 = vmatpush1.xpose.msra.mxu0 %v1678
    %1769 = vmatprep.subr.mxu0 0.0
    %1770 = vmatpush1.xpose.msra.mxu0 %v1681
    %1771 = vmatprep.subr.mxu0 0.0
    %1772 = vmatpush1.xpose.msra.mxu0 %v1684
    %1773 = vmatprep.subr.mxu0 0.0
    %1774 = vmatpush1.xpose.msra.mxu0 %v1687
    %1775 = vmatprep.subr.mxu0 0.0
    %1776 = vmatpush1.xpose.msra.mxu0 %v1690
    %1777 = vmatprep.subr.mxu0 0.0
    %1778 = vmatpush1.xpose.msra.mxu0 %v1693
    %1779 = vmatprep.subr.mxu0 0.0
    %1780 = vmatpush1.xpose.msra.mxu0 %v1696
    %1781 = vmatprep.subr.mxu0 0.0
    %1782 = vmatpush1.xpose.msra.mxu0 %v1699
    %1783 = vmatprep.subr.mxu0 0.0
    %1784 = vmatpush1.xpose.msra.mxu0 %v1702
    %1785 = vmatprep.subr.mxu0 0.0
    %1786 = vmatpush1.xpose.msra.mxu0 %v1705
    %1787 = vmatprep.subr.mxu0 0.0
    %1788 = vmatpush1.xpose.msra.mxu0 %v1708
    %1789 = vmatprep.subr.mxu0 0.0
    %1790 = vmatpush1.xpose.msra.mxu0 %v1711
    %1791 = vmatprep.subr.mxu0 0.0
    %1792 = vmatpush1.xpose.msra.mxu0 %v1714
    %1793 = vmatprep.subr.mxu0 0.0
    %1794 = vmatpush1.xpose.msra.mxu0 %v1717
    %1795 = vmatprep.subr.mxu0 0.0
    %1796 = vmatpush1.xpose.msra.mxu0 %v1720
    %1797 = vmatprep.subr.mxu0 0.0
    %1798 = vmatpush1.xpose.msra.mxu0 %v1723
    %1799 = vmatprep.subr.mxu0 0.0
    %1800 = vmatpush1.xpose.msra.mxu0 %v1726
    %1801 = vmatprep.subr.mxu0 0.0
    %1802 = vmatpush1.xpose.msra.mxu0 %v1729
    %1803 = vmatprep.subr.mxu0 0.0
    %1804 = vmatpush1.xpose.msra.mxu0 %v1732
    %1805 = vmatprep.subr.mxu0 0.0
    %1806 = vmatpush1.xpose.msra.mxu0 %v1735
    %1807 = vmatprep.subr.mxu0 0.0
    %1808 = vmatpush1.xpose.msra.mxu0 %v1738
    %1809 = vmatprep.subr.mxu0 0.0
    %1810 = vmatpush1.xpose.msra.mxu0 %v1741
    %1811 = vmatprep.subr.mxu0 0.0
    %1812 = vmatpush1.xpose.msra.mxu0 %v1744
    %1813 = vmatprep.subr.mxu0 0.0
    %1814 = vmatpush1.xpose.msra.mxu0 %v1747
    %1815 = vmatprep.subr.mxu0 0.0
    %1816 = vmatpush1.xpose.msra.mxu0 %v1750
    %1817 = vmatprep.subr.mxu0 0.0
    %1818 = vmatpush1.xpose.msra.mxu0 %v1753
    %1819 = vmatprep.mubr.f32.mxu0 0.0
    %1820 = vmatmul.mubr.f32.gmra.mrb[0].mxu0 %v1325
    %v1821 = vpop.f32.mrb[0].mxu0
    %v1822 = vadd.f32 0.0, %v1821
    %v1823 = vpop.f32.mrb[0].mxu0
    %v1824 = vadd.f32 0.0, %v1823
    %1825 = vdwg.mxu0
    %v1826 = vmul.f32 %v1822, 0.17677669
    %v1827 = vmul.f32 %v1824, 0.17677669
    %v1828 = vmax.f32 %v1826, %v1827
    %1829 = vmax.xlane.f32.xlu0 %v1828
    %v1830 = vpop.xlane.xlu0 %1829
    %v1831 = vsub.f32 %v1826, %v1830
    %v1832 = vsub.f32 %v1827, %v1830
    %v1833 = vmul.f32 %v1831, 1.442695
    %v1834 = vpow.pop %v1833
    %v1835 = vmul.f32 %v1832, 1.442695
    %v1836 = vpow.pop %v1835
    %v1837 = vadd.f32 %v1834, %v1836
    %1838 = vadd.xlane.f32.xlu0 %v1837
    %v1839 = vpop.xlane.xlu0 %1838
    %v1840 = vrcp.pop %v1839
    %v1841 = vmul.f32 %v1834, %v1840
    %v1842 = vmul.f32 %v1836, %v1840
    %1843 = vmatprep.subr.mxu0 0.0
    %1844 = vmatpush1.msra.mxu0 %v1165
    %1845 = vmatprep.subr.mxu0 0.0
    %1846 = vmatpush1.msra.mxu0 %v1170
    %1847 = vmatprep.subr.mxu0 0.0
    %1848 = vmatpush1.msra.mxu0 %v1175
    %1849 = vmatprep.subr.mxu0 0.0
    %1850 = vmatpush1.msra.mxu0 %v1180
    %1851 = vmatprep.subr.mxu0 0.0
    %1852 = vmatpush1.msra.mxu0 %v1185
    %1853 = vmatprep.subr.mxu0 0.0
    %1854 = vmatpush1.msra.mxu0 %v1190
    %1855 = vmatprep.subr.mxu0 0.0
    %1856 = vmatpush1.msra.mxu0 %v1195
    %1857 = vmatprep.subr.mxu0 0.0
    %1858 = vmatpush1.msra.mxu0 %v1200
    %1859 = vmatprep.subr.mxu0 0.0
    %1860 = vmatpush1.msra.mxu0 %v1205
    %1861 = vmatprep.subr.mxu0 0.0
    %1862 = vmatpush1.msra.mxu0 %v1210
    %1863 = vmatprep.subr.mxu0 0.0
    %1864 = vmatpush1.msra.mxu0 %v1215
    %1865 = vmatprep.subr.mxu0 0.0
    %1866 = vmatpush1.msra.mxu0 %v1220
    %1867 = vmatprep.subr.mxu0 0.0
    %1868 = vmatpush1.msra.mxu0 %v1225
    %1869 = vmatprep.subr.mxu0 0.0
    %1870 = vmatpush1.msra.mxu0 %v1230
    %1871 = vmatprep.subr.mxu0 0.0
    %1872 = vmatpush1.msra.mxu0 %v1235
    %1873 = vmatprep.subr.mxu0 0.0
    %1874 = vmatpush1.msra.mxu0 %v1240
    %1875 = vmatprep.subr.mxu0 0.0
    %1876 = vmatpush1.msra.mxu0 %v1245
    %1877 = vmatprep.subr.mxu0 0.0
    %1878 = vmatpush1.msra.mxu0 %v1250
    %1879 = vmatprep.subr.mxu0 0.0
    %1880 = vmatpush1.msra.mxu0 %v1255
    %1881 = vmatprep.subr.mxu0 0.0
    %1882 = vmatpush1.msra.mxu0 %v1260
    %1883 = vmatprep.subr.mxu0 0.0
    %1884 = vmatpush1.msra.mxu0 %v1265
    %1885 = vmatprep.subr.mxu0 0.0
    %1886 = vmatpush1.msra.mxu0 %v1270
    %1887 = vmatprep.subr.mxu0 0.0
    %1888 = vmatpush1.msra.mxu0 %v1275
    %1889 = vmatprep.subr.mxu0 0.0
    %1890 = vmatpush1.msra.mxu0 %v1280
    %1891 = vmatprep.subr.mxu0 0.0
    %1892 = vmatpush1.msra.mxu0 %v1285
    %1893 = vmatprep.subr.mxu0 0.0
    %1894 = vmatpush1.msra.mxu0 %v1290
    %1895 = vmatprep.subr.mxu0 0.0
    %1896 = vmatpush1.msra.mxu0 %v1295
    %1897 = vmatprep.subr.mxu0 0.0
    %1898 = vmatpush1.msra.mxu0 %v1300
    %1899 = vmatprep.subr.mxu0 0.0
    %1900 = vmatpush1.msra.mxu0 %v1305
    %1901 = vmatprep.subr.mxu0 0.0
    %1902 = vmatpush1.msra.mxu0 %v1310
    %1903 = vmatprep.subr.mxu0 0.0
    %1904 = vmatpush1.msra.mxu0 %v1315
    %1905 = vmatprep.subr.mxu0 0.0
    %1906 = vmatpush1.msra.mxu0 %v1320
    %1907 = vmatprep.mubr.f32.mxu0 %v1842
    %1908 = vmatmul.mubr.f32.gmra.mrb[0].mxu0 %v1841
    %v1909 = vpop.f32.mrb[0].mxu0
    %v1910 = vadd.f32 0.0, %v1909
    %v1911 = vpop.f32.mrb[0].mxu0
    %1912 = vdwg.mxu0
    %v1914 = vsel %vm745, %v1910, 0
    %1916 = vmatprep.subr.mxu0 0.0
    %1917 = vmatpush1.msra.mxu0 %v1581
    %1918 = vmatprep.subr.mxu0 0.0
    %1919 = vmatpush1.msra.mxu0 %v1582
    %1920 = vmatprep.subr.mxu0 0.0
    %1921 = vmatpush1.msra.mxu0 %v1583
    %1922 = vmatprep.subr.mxu0 0.0
    %1923 = vmatpush1.msra.mxu0 %v1584
    %1924 = vmatprep.subr.mxu0 0.0
    %1925 = vmatpush1.msra.mxu0 0.0
    %1926 = vmatprep.subr.mxu0 0.0
    %1927 = vmatpush1.msra.mxu0 0.0
    %1928 = vmatprep.subr.mxu0 0.0
    %1929 = vmatpush1.msra.mxu0 0.0
    %1930 = vmatprep.subr.mxu0 0.0
    %1931 = vmatpush1.msra.mxu0 0.0
    %1932 = vmatprep.subr.mxu0 0.0
    %1933 = vmatpush1.msra.mxu0 0.0
    %1934 = vmatprep.subr.mxu0 0.0
    %1935 = vmatpush1.msra.mxu0 0.0
    %1936 = vmatprep.subr.mxu0 0.0
    %1937 = vmatpush1.msra.mxu0 0.0
    %1938 = vmatprep.subr.mxu0 0.0
    %1939 = vmatpush1.msra.mxu0 0.0
    %1940 = vmatprep.subr.mxu0 0.0
    %1941 = vmatpush1.msra.mxu0 0.0
    %1942 = vmatprep.subr.mxu0 0.0
    %1943 = vmatpush1.msra.mxu0 0.0
    %1944 = vmatprep.subr.mxu0 0.0
    %1945 = vmatpush1.msra.mxu0 0.0
    %1946 = vmatprep.subr.mxu0 0.0
    %1947 = vmatpush1.msra.mxu0 0.0
    %1948 = vmatprep.subr.mxu0 0.0
    %1949 = vmatpush1.msra.mxu0 0.0
    %1950 = vmatprep.subr.mxu0 0.0
    %1951 = vmatpush1.msra.mxu0 0.0
    %1952 = vmatprep.subr.mxu0 0.0
    %1953 = vmatpush1.msra.mxu0 0.0
    %1954 = vmatprep.subr.mxu0 0.0
    %1955 = vmatpush1.msra.mxu0 0.0
    %1956 = vmatprep.subr.mxu0 0.0
    %1957 = vmatpush1.msra.mxu0 0.0
    %1958 = vmatprep.subr.mxu0 0.0
    %1959 = vmatpush1.msra.mxu0 0.0
    %1960 = vmatprep.subr.mxu0 0.0
    %1961 = vmatpush1.msra.mxu0 0.0
    %1962 = vmatprep.subr.mxu0 0.0
    %1963 = vmatpush1.msra.mxu0 0.0
    %1964 = vmatprep.subr.mxu0 0.0
    %1965 = vmatpush1.msra.mxu0 0.0
    %1966 = vmatprep.subr.mxu0 0.0
    %1967 = vmatpush1.msra.mxu0 0.0
    %1968 = vmatprep.subr.mxu0 0.0
    %1969 = vmatpush1.msra.mxu0 0.0
    %1970 = vmatprep.subr.mxu0 0.0
    %1971 = vmatpush1.msra.mxu0 0.0
    %1972 = vmatprep.subr.mxu0 0.0
    %1973 = vmatpush1.msra.mxu0 0.0
    %1974 = vmatprep.subr.mxu0 0.0
    %1975 = vmatpush1.msra.mxu0 0.0
    %1976 = vmatprep.subr.mxu0 0.0
    %1977 = vmatpush1.msra.mxu0 0.0
    %1978 = vmatprep.subr.mxu0 0.0
    %1979 = vmatpush1.msra.mxu0 0.0
    %1980 = vmatprep.mubr.f32.mxu0 0.0
    %1981 = vmatmul.mubr.f32.gmra.mrb[0].mxu0 %v1914
    %v1982 = vpop.f32.mrb[0].mxu0
    %v1983 = vadd.f32 0.0, %v1982
    %v1984 = vpop.f32.mrb[0].mxu0
    %1985 = vdwg.mxu0
    %v1986 = vmax.f32 %v1983, 0.0
    %v1987 = vld [vmem:[%s5] sm:$0xff]
    %v1988 = vld [vmem:[%s5 + $0x8] sm:$0xff]
    %v1989 = vld [vmem:[%s5 + $0x10] sm:$0xff]
    %v1990 = vld [vmem:[%s5 + $0x18] sm:$0xff]
    %v1991 = vld [vmem:[%s6] sm:$0x1]
    %v1993 = vlaneseq
    %v1994 = vshrl.u32 %v1993, 7
    %v1995 = vsub.s32 0, %v1994
    %v1996 = vrot.slane %v1991, %v1995
    %v1999 = vsel %vm745, %v1658, 0
    %v2002 = vsel %vm745, %v1986, 0
    %2004 = vmatprep.subr.mxu0 0.0
    %2005 = vmatpush1.msra.mxu0 %v1987
    %2006 = vmatprep.subr.mxu0 0.0
    %2007 = vmatpush1.msra.mxu0 %v1988
    %2008 = vmatprep.subr.mxu0 0.0
    %2009 = vmatpush1.msra.mxu0 %v1989
    %2010 = vmatprep.subr.mxu0 0.0
    %2011 = vmatpush1.msra.mxu0 %v1990
    %2012 = vmatprep.subr.mxu0 0.0
    %2013 = vmatpush1.msra.mxu0 0.0
    %2014 = vmatprep.subr.mxu0 0.0
    %2015 = vmatpush1.msra.mxu0 0.0
    %2016 = vmatprep.subr.mxu0 0.0
    %2017 = vmatpush1.msra.mxu0 0.0
    %2018 = vmatprep.subr.mxu0 0.0
    %2019 = vmatpush1.msra.mxu0 0.0
    %2020 = vmatprep.subr.mxu0 0.0
    %2021 = vmatpush1.msra.mxu0 0.0
    %2022 = vmatprep.subr.mxu0 0.0
    %2023 = vmatpush1.msra.mxu0 0.0
    %2024 = vmatprep.subr.mxu0 0.0
    %2025 = vmatpush1.msra.mxu0 0.0
    %2026 = vmatprep.subr.mxu0 0.0
    %2027 = vmatpush1.msra.mxu0 0.0
    %2028 = vmatprep.subr.mxu0 0.0
    %2029 = vmatpush1.msra.mxu0 0.0
    %2030 = vmatprep.subr.mxu0 0.0
    %2031 = vmatpush1.msra.mxu0 0.0
    %2032 = vmatprep.subr.mxu0 0.0
    %2033 = vmatpush1.msra.mxu0 0.0
    %2034 = vmatprep.subr.mxu0 0.0
    %2035 = vmatpush1.msra.mxu0 0.0
    %2036 = vmatprep.subr.mxu0 0.0
    %2037 = vmatpush1.msra.mxu0 0.0
    %2038 = vmatprep.subr.mxu0 0.0
    %2039 = vmatpush1.msra.mxu0 0.0
    %2040 = vmatprep.subr.mxu0 0.0
    %2041 = vmatpush1.msra.mxu0 0.0
    %2042 = vmatprep.subr.mxu0 0.0
    %2043 = vmatpush1.msra.mxu0 0.0
    %2044 = vmatprep.subr.mxu0 0.0
    %2045 = vmatpush1.msra.mxu0 0.0
    %2046 = vmatprep.subr.mxu0 0.0
    %2047 = vmatpush1.msra.mxu0 0.0
    %2048 = vmatprep.subr.mxu0 0.0
    %2049 = vmatpush1.msra.mxu0 0.0
    %2050 = vmatprep.subr.mxu0 0.0
    %2051 = vmatpush1.msra.mxu0 0.0
    %2052 = vmatprep.subr.mxu0 0.0
    %2053 = vmatpush1.msra.mxu0 0.0
    %2054 = vmatprep.subr.mxu0 0.0
    %2055 = vmatpush1.msra.mxu0 0.0
    %2056 = vmatprep.subr.mxu0 0.0
    %2057 = vmatpush1.msra.mxu0 0.0
    %2058 = vmatprep.subr.mxu0 0.0
    %2059 = vmatpush1.msra.mxu0 0.0
    %2060 = vmatprep.subr.mxu0 0.0
    %2061 = vmatpush1.msra.mxu0 0.0
    %2062 = vmatprep.subr.mxu0 0.0
    %2063 = vmatpush1.msra.mxu0 0.0
    %2064 = vmatprep.subr.mxu0 0.0
    %2065 = vmatpush1.msra.mxu0 0.0
    %2066 = vmatprep.subr.mxu0 0.0
    %2067 = vmatpush1.msra.mxu0 0.0
    %2068 = vmatprep.mubr.f32.mxu0 0.0
    %2069 = vmatmul.mubr.f32.gmra.mrb[0].mxu0 %v1999
    %v2070 = vpop.f32.mrb[0].mxu0
    %v2071 = vadd.f32 %v1996, %v2070
    %v2072 = vpop.f32.mrb[0].mxu0
    %2073 = vmatprep.mubr.f32.mxu0 0.0
    %2074 = vmatmul.mubr.f32.gmra.mrb[0].mxu0 %v2002
    %v2075 = vpop.f32.mrb[0].mxu0
    %v2076 = vadd.f32 %v1996, %v2075
    %v2077 = vpop.f32.mrb[0].mxu0
    %2078 = vdwg.mxu0
    %v2079 = vxor.u32 %v2071, 2147483648
    %v2080 = vxor.u32 %v2076, 2147483648
    %v2081 = vmul.f32 %v2079, 1.442695
    %v2082 = vpow.pop %v2081
    %v2083 = vmul.f32 %v2080, 1.442695
    %v2084 = vpow.pop %v2083
    %v2085 = vadd.f32 %v2082, 1.0
    %v2086 = vadd.f32 %v2084, 1.0
    %v2087 = vrcp.pop %v2085
    %v2088 = vmul.f32 1.0, %v2087
    %v2089 = vrcp.pop %v2086
    %v2090 = vmul.f32 1.0, %v2089
    %vm2091 = vcmask 64512
    %v2092 = vsel %vm2091, %v2088, -inf
    %2093 = vmax.xlane.f32.xlu0 %v2092
    %v2094 = vpop.xlane.xlu0 %2093
    %v2095 = vsel %vm2091, %v2090, -inf
    %2096 = vmax.xlane.f32.xlu0 %v2095
    %v2097 = vpop.xlane.xlu0 %2096
    %v2098 = vlaneseq
    %v2099 = vand.u32 %v2098, 127
    %vm2100 = vcmp.eq.f32.partialorder %v2088, %v2094
    %vm2101 = vcmp.eq.f32.partialorder %v2090, %v2097
    %v2102 = vsel %vm2100, %v2099, 8
    %v2103 = vsel %vm2101, %v2099, 8
    %v2104 = vsel %vm2091, %v2102, 2147483647
    %v2105 = vand.u32 %v2104, 65535
    %v2106 = vshra.s32 %v2104, 16
    %v2107 = vcvt.s32.f32 %v2105
    %v2108 = vcvt.s32.f32 %v2106
    %2109 = vmin.xlane.f32.xlu0 %v2108
    %v2110 = vpop.xlane.xlu0 %2109
    %vm2111 = vcmp.eq.f32.partialorder %v2108, %v2110
    %v2112 = vsel %vm2111, %v2107, inf
    %2113 = vmin.xlane.f32.xlu0 %v2112
    %v2114 = vpop.xlane.xlu0 %2113
    %v2115 = vcvt.f32.s32 %v2114
    %v2116 = vcvt.f32.s32 %v2110
    %v2117 = vshll.u32 %v2116, 16
    %v2118 = vadd.s32 %v2117, %v2115
    %v2119 = vsel %vm2091, %v2103, 2147483647
    %v2120 = vand.u32 %v2119, 65535
    %v2121 = vshra.s32 %v2119, 16
    %v2122 = vcvt.s32.f32 %v2120
    %v2123 = vcvt.s32.f32 %v2121
    %2124 = vmin.xlane.f32.xlu0 %v2123
    %v2125 = vpop.xlane.xlu0 %2124
    %vm2126 = vcmp.eq.f32.partialorder %v2123, %v2125
    %v2127 = vsel %vm2126, %v2122, inf
    %2128 = vmin.xlane.f32.xlu0 %v2127
    %v2129 = vpop.xlane.xlu0 %2128
    %v2130 = vcvt.f32.s32 %v2129
    %v2131 = vcvt.f32.s32 %v2125
    %v2132 = vshll.u32 %v2131, 16
    %v2133 = vadd.s32 %v2132, %v2130
    %v2134 = vcvt.s32.f32 %v2118
    %v2135 = vcvt.s32.f32 %v2133
    %v2136 = vld [vmem:[%s7] sm:$0xf]
    %2139 = vrot.lane.b32.xlu0 %v2088, 120
    %v2140 = vpop.permute.xlu0 %2139
    %2141 = vrot.lane.b32.xlu0 %v2090, 120
    %v2142 = vpop.permute.xlu0 %2141
    %v2143 = vsel %vm95, %v2140, 0
    %v2145 = vsel %vm95, %v2142, 0
    %v2148 = vsel %vm288, %v2136, 0
    %2150 = vmatprep.subr.mxu0 0.0
    %2151 = vmatpush1.msra.mxu0 %v2148
    %2152 = vmatprep.subr.mxu0 0.0
    %2153 = vmatpush1.msra.mxu0 0.0
    %2154 = vmatprep.subr.mxu0 0.0
    %2155 = vmatpush1.msra.mxu0 0.0
    %2156 = vmatprep.subr.mxu0 0.0
    %2157 = vmatpush1.msra.mxu0 0.0
    %2158 = vmatprep.subr.mxu0 0.0
    %2159 = vmatpush1.msra.mxu0 0.0
    %2160 = vmatprep.subr.mxu0 0.0
    %2161 = vmatpush1.msra.mxu0 0.0
    %2162 = vmatprep.subr.mxu0 0.0
    %2163 = vmatpush1.msra.mxu0 0.0
    %2164 = vmatprep.subr.mxu0 0.0
    %2165 = vmatpush1.msra.mxu0 0.0
    %2166 = vmatprep.subr.mxu0 0.0
    %2167 = vmatpush1.msra.mxu0 0.0
    %2168 = vmatprep.subr.mxu0 0.0
    %2169 = vmatpush1.msra.mxu0 0.0
    %2170 = vmatprep.subr.mxu0 0.0
    %2171 = vmatpush1.msra.mxu0 0.0
    %2172 = vmatprep.subr.mxu0 0.0
    %2173 = vmatpush1.msra.mxu0 0.0
    %2174 = vmatprep.subr.mxu0 0.0
    %2175 = vmatpush1.msra.mxu0 0.0
    %2176 = vmatprep.subr.mxu0 0.0
    %2177 = vmatpush1.msra.mxu0 0.0
    %2178 = vmatprep.subr.mxu0 0.0
    %2179 = vmatpush1.msra.mxu0 0.0
    %2180 = vmatprep.subr.mxu0 0.0
    %2181 = vmatpush1.msra.mxu0 0.0
    %2182 = vmatprep.subr.mxu0 0.0
    %2183 = vmatpush1.msra.mxu0 0.0
    %2184 = vmatprep.subr.mxu0 0.0
    %2185 = vmatpush1.msra.mxu0 0.0
    %2186 = vmatprep.subr.mxu0 0.0
    %2187 = vmatpush1.msra.mxu0 0.0
    %2188 = vmatprep.subr.mxu0 0.0
    %2189 = vmatpush1.msra.mxu0 0.0
    %2190 = vmatprep.subr.mxu0 0.0
    %2191 = vmatpush1.msra.mxu0 0.0
    %2192 = vmatprep.subr.mxu0 0.0
    %2193 = vmatpush1.msra.mxu0 0.0
    %2194 = vmatprep.subr.mxu0 0.0
    %2195 = vmatpush1.msra.mxu0 0.0
    %2196 = vmatprep.subr.mxu0 0.0
    %2197 = vmatpush1.msra.mxu0 0.0
    %2198 = vmatprep.subr.mxu0 0.0
    %2199 = vmatpush1.msra.mxu0 0.0
    %2200 = vmatprep.subr.mxu0 0.0
    %2201 = vmatpush1.msra.mxu0 0.0
    %2202 = vmatprep.subr.mxu0 0.0
    %2203 = vmatpush1.msra.mxu0 0.0
    %2204 = vmatprep.subr.mxu0 0.0
    %2205 = vmatpush1.msra.mxu0 0.0
    %2206 = vmatprep.subr.mxu0 0.0
    %2207 = vmatpush1.msra.mxu0 0.0
    %2208 = vmatprep.subr.mxu0 0.0
    %2209 = vmatpush1.msra.mxu0 0.0
    %2210 = vmatprep.subr.mxu0 0.0
    %2211 = vmatpush1.msra.mxu0 0.0
    %2212 = vmatprep.subr.mxu0 0.0
    %2213 = vmatpush1.msra.mxu0 0.0
    %2214 = vmatprep.mubr.f32.mxu0 0.0
    %2215 = vmatmul.mubr.f32.gmra.mrb[0].mxu0 %v2143
    %v2216 = vpop.f32.mrb[0].mxu0
    %v2217 = vadd.f32 0.0, %v2216
    %v2218 = vpop.f32.mrb[0].mxu0
    %2219 = vmatprep.mubr.f32.mxu0 0.0
    %2220 = vmatmul.mubr.f32.gmra.mrb[0].mxu0 %v2145
    %v2221 = vpop.f32.mrb[0].mxu0
    %v2222 = vadd.f32 0.0, %v2221
    %v2223 = vpop.f32.mrb[0].mxu0
    %2224 = vdwg.mxu0
    %2225 = vst [vmem:[#allocation2] sm:$0xff] 0.0
    %2226 = vst [vmem:[#allocation2 + $0x8] sm:$0xff] 0.0
    %2227 = vst [vmem:[#allocation2 + $0x10] sm:$0xff] 0.0
    %2228 = vst [vmem:[#allocation2 + $0x18] sm:$0xff] 0.0
    %2229 = vst [vmem:[#allocation2 + $0x20] sm:$0xff] 0.0
    %2230 = vst [vmem:[#allocation2 + $0x28] sm:$0xff] 0.0
    %2231 = vst [vmem:[#allocation2 + $0x30] sm:$0xff] 0.0
    %2232 = vst [vmem:[#allocation2 + $0x38] sm:$0xff] 0.0
    %2233 = vst [vmem:[#allocation2 + $0x40] sm:$0xff] 0.0
    %2234 = vst [vmem:[#allocation2 + $0x48] sm:$0xff] 0.0
    %2235 = vst [vmem:[#allocation2 + $0x50] sm:$0xff] 0.0
    %2236 = vst [vmem:[#allocation2 + $0x58] sm:$0xff] 0.0
    %2237 = vst.msk [vmem:[#allocation2] sm:$0xff] %vm2091, %v2071
    %2238 = vst.msk [vmem:[#allocation2 + $0x8] sm:$0xff] %vm2091, %v2076
    %2241 = vst.msk [vmem:[#allocation2 + $0x10] sm:$0xff] %vm95, %v2140
    %2242 = vst.msk [vmem:[#allocation2 + $0x18] sm:$0xff] %vm95, %v2142
    %2243 = vst.msk [vmem:[#allocation2 + $0x20] sm:$0xff] %vm95, %v2217
    %2244 = vst.msk [vmem:[#allocation2 + $0x28] sm:$0xff] %vm95, %v2222
    %vm2245 = vcmask 7168
    %2246 = vst.msk [vmem:[#allocation2 + $0x30] sm:$0xff] %vm2245, %v2094
    %2247 = vst.msk [vmem:[#allocation2 + $0x38] sm:$0xff] %vm2245, %v2097
    %2248 = vst.msk [vmem:[#allocation2 + $0x40] sm:$0xff] %vm2245, %v2134
    %2249 = vst.msk [vmem:[#allocation2 + $0x48] sm:$0xff] %vm2245, %v2135
    %2250 = vst.msk [vmem:[#allocation2 + $0x50] sm:$0xff] %vm745, %v1658
    %2251 = vst.msk [vmem:[#allocation2 + $0x58] sm:$0xff] %vm745, %v1986
    // Predicated region
    $region34: #{tpu_custom_call.1} parent=1 // pred_check
      _
    $region35: #{tpu_custom_call.1} parent=1 // pred_check_branch
      %2253 = sbr.rel (0) target = $region37
    $region36: #{tpu_custom_call.1} parent=1 // pred_region
      %s2255 = ssub.s32 1536, 1536
      %2256 = vsyncadd [#allocation3], %s2255
      %s2257 = sshll.u32 [#allocation2], 4
      %s2258 = int_to_ptr.vmem [resolvable:$true] %s2257
      %2263 = dma.vmem_to_hbm [thread:$0]  %s2258, 1536, %s8, [#allocation3], 128, 128, 8
    $region37: #{tpu_custom_call.1} parent=1 // pred_fallthru
      _
    // Predicated region
    $region38: #{tpu_custom_call.1} parent=1 // pred_check
      _
    $region39: #{tpu_custom_call.1} parent=1 // pred_check_branch
      %2265 = sbr.rel (0) target = $region41
    $region40: #{tpu_custom_call.1} parent=1 // pred_region
      %2266 = dma.done [#allocation3], 1536
    $region41: #{tpu_custom_call.1} parent=1 // pred_fallthru
      _
    %2267 = vsyncpa [#allocation3], 1

</llo_original>
